<compile_context>
chip_gen: v7x
topology: tpu7x:2x2x1
jax: 0.10.0
libtpu: 0.0.40
codegen_flags: <defaults>
</compile_context>

<pallas_src>
import functools
import math

import jax
import jax.numpy as jnp
from jax.experimental import pallas as pl
from jax.experimental.pallas import tpu as pltpu


# ----------------------------- config (small) -------------------------------
CFG = dict(
    vocab_size=64,
    embedding_dim=32,
    head_size=8,
    num_head=4,          # num_head * head_size == embedding_dim
    dim_ff=64,
    prefill_size=8,      # sequence length L
    num_layer=2,
    batch_size=2,
)
LN_EPS = 1e-5
VOCAB_PAD = 128          # pad logits to a full 128-lane (unmasked) store
MASK_NEG = -1e30         # finite "-inf" for the additive causal mask


def _layer_norm(x, gamma, beta, eps=LN_EPS):
    mean = jnp.mean(x, axis=-1, keepdims=True)
    var = jnp.mean((x - mean) ** 2, axis=-1, keepdims=True)
    return (x - mean) * jax.lax.rsqrt(var + eps) * gamma + beta


# --------------------------- fused forward kernel ----------------------------
def lm_kernel(idx_ref, tok_ref, pos_ref,
              wqkv_ref, wo_ref, w1_ref, w2_ref, lvec_ref,
              wde_ref, fvec_ref,
              out_ref,
              *, num_layer, num_head, head_size, seq, vocab, dim_ff):
    H, hs, L, F = num_head, head_size, seq, dim_ff
    E = H * hs
    scale = 1.0 / math.sqrt(hs)

    # ---- token + position embedding (one-hot matmul gather, stays in VMEM) ----
    ids = idx_ref[0]                                                   # (L, 1) int32
    one_hot = (ids == jax.lax.broadcasted_iota(jnp.int32, (L, vocab), 1)
               ).astype(jnp.bfloat16)                                  # (L, V)
    x = jnp.dot(one_hot, tok_ref[...],
                preferred_element_type=jnp.float32) + pos_ref[...]     # (L, E) f32

    # ---- causal additive mask, built in-kernel and hoisted out of the loop ----
    row = jax.lax.broadcasted_iota(jnp.int32, (L, L), 0)
    col = jax.lax.broadcasted_iota(jnp.int32, (L, L), 1)
    mask = jnp.where(row >= col, 0.0, MASK_NEG).astype(jnp.float32)    # (L, L)

    # ---- transformer blocks (statically unrolled over layers) ----
    for l in range(num_layer):
        lvec = lvec_ref[l]                                             # (6, max(E,F)) f32

        # --- attention sublayer: x = x + MHA(LN1(x)) ---
        x_ln = _layer_norm(x, lvec[0:1, :E], lvec[1:2, :E])
        qkv = jnp.dot(x_ln.astype(jnp.bfloat16), wqkv_ref[l],
                      preferred_element_type=jnp.float32)              # (L, 3E) f32

        # Static per-head lane slices, stacked into head-batched operands.
        q = jnp.stack([qkv[:,         h * hs:(h + 1) * hs] for h in range(H)], 0)
        k = jnp.stack([qkv[:,     E + h * hs: E + (h + 1) * hs] for h in range(H)], 0)
        v = jnp.stack([qkv[:, 2 * E + h * hs: 2 * E + (h + 1) * hs] for h in range(H)], 0)
        q = q.astype(jnp.bfloat16)
        k = k.astype(jnp.bfloat16)
        v = v.astype(jnp.bfloat16)                                     # (H, L, hs)

        att = jnp.einsum('nld,nmd->nlm', q, k,
                         preferred_element_type=jnp.float32) * scale   # (H, L, L)
        att = att + mask                                               # broadcast over H
        att = att - jnp.max(att, axis=-1, keepdims=True)               # stable softmax
        p = jnp.exp(att)
        p = p * pl.reciprocal(jnp.sum(p, axis=-1, keepdims=True), approx=True)
        # TODO(synk): nn.Dropout on attention probs is identity in eval mode.
        ctx = jnp.einsum('nlm,nmd->nld', p.astype(jnp.bfloat16), v,
                         preferred_element_type=jnp.float32)           # (H, L, hs)

        # Concat heads back to a lane-dense (L, E) tile, one (L,E)@(E,E) matmul.
        ctx = jnp.concatenate([ctx[h] for h in range(H)], axis=-1)     # (L, E) f32
        attn_out = jnp.dot(ctx.astype(jnp.bfloat16), wo_ref[l],
                           preferred_element_type=jnp.float32)         # (L, E) f32
        # TODO(synk): nn.Dropout after out_proj is identity in eval mode.
        x = x + attn_out

        # --- feed-forward sublayer: x = x + FF(LN2(x)) ---
        x_ln2 = _layer_norm(x, lvec[2:3, :E], lvec[3:4, :E])
        h1 = jnp.dot(x_ln2.astype(jnp.bfloat16), w1_ref[l],
                     preferred_element_type=jnp.float32) + lvec[5:6, :F]
        h1 = jnp.maximum(h1, 0.0)                                      # ReLU
        ff = jnp.dot(h1.astype(jnp.bfloat16), w2_ref[l],
                     preferred_element_type=jnp.float32) + lvec[4:5, :E]
        # TODO(synk): nn.Dropout after the FF contraction is identity in eval mode.
        x = x + ff

    # ---- final LayerNorm + de-embedding (vocab zero-padded to 128 lanes) ----
    x = _layer_norm(x, fvec_ref[0:1, :E], fvec_ref[1:2, :E])
    logits = jnp.dot(x.astype(jnp.bfloat16), wde_ref[...],
                     preferred_element_type=jnp.float32) + fvec_ref[2:3, :]
    out_ref[0] = logits.astype(out_ref.dtype)


# ------------------------------ model wrapper --------------------------------
def language_model_forward(idx, kp, cfg):
    B, L = idx.shape
    V = cfg["vocab_size"]
    E, F, NL = cfg["embedding_dim"], cfg["dim_ff"], cfg["num_layer"]
    LV = max(E, F)

    kernel = functools.partial(
        lm_kernel,
        num_layer=NL, num_head=cfg["num_head"], head_size=cfg["head_size"],
        seq=L, vocab=V, dim_ff=F)

    idx3 = idx.reshape(B, L, 1).astype(jnp.int32)

    def full(shape):   # weight resident across the whole grid (same block each step)
        return pl.BlockSpec(shape, lambda b, _n=len(shape): (0,) * _n)

    logits_pad = pl.pallas_call(
        kernel,
        out_shape=jax.ShapeDtypeStruct((B, L, VOCAB_PAD), jnp.float32),
        grid=(B,),
        in_specs=[
            pl.BlockSpec((1, L, 1), lambda b: (b, 0, 0)),   # idx  (per-sequence)
            full((V, E)),                                   # token table  (bf16)
            full((L, E)),                                   # position table (f32)
            full((NL, E, 3 * E)),                           # packed Wq|Wk|Wv (bf16)
            full((NL, E, E)),                               # Wo (bf16)
            full((NL, E, F)),                               # W1 (bf16)
            full((NL, F, E)),                               # W2 (bf16)
            full((NL, 6, LV)),                              # packed per-layer vectors (f32)
            full((E, VOCAB_PAD)),                           # de-embed weight (bf16)
            full((3, VOCAB_PAD)),                           # lnf_g | lnf_b | b_de (f32)
        ],
        out_specs=pl.BlockSpec((1, L, VOCAB_PAD), lambda b: (b, 0, 0)),
        compiler_params=pltpu.CompilerParams(
            dimension_semantics=("parallel",)),   # v7x: shard batch across TCs
        # NOTE: default scoped-VMEM limit is ample; working set here is <1 MiB.
    )(idx3, kp["tok_table"], kp["pos"], kp["wqkv"], kp["wo"],
      kp["w1"], kp["w2"], kp["lvec"], kp["w_de"], kp["fvec"])

    return logits_pad[:, :, :V]


# ---------------------------- parameter creation -----------------------------
def init_params(key, cfg):
    """Parameters in the natural (torch-equivalent, pre-transposed (in,out)) layout."""
    E, F, V, L = (cfg["embedding_dim"], cfg["dim_ff"],
                  cfg["vocab_size"], cfg["prefill_size"])
    n_keys = 4 + cfg["num_layer"] * 8
    keys = iter(jax.random.split(key, n_keys))

    def w(shape, scale=0.02):
        return (scale * jax.random.normal(next(keys), shape)).astype(jnp.float32)

    params = dict(
        tok_table=w((V, E), 1.0),
        pos_table=w((L, E), 1.0),
        lnf_g=jnp.ones((E,), jnp.float32),
        lnf_b=jnp.zeros((E,), jnp.float32),
        w_de=w((E, V)),          # stored as (in, out): x @ w_de == torch x @ W.T
        b_de=w((V,)),
        blocks=[],
    )
    for _ in range(cfg["num_layer"]):
        params["blocks"].append(dict(
            wq=w((E, E)), wk=w((E, E)), wv=w((E, E)), wo=w((E, E)),
            ln1_g=jnp.ones((E,), jnp.float32), ln1_b=jnp.zeros((E,), jnp.float32),
            ln2_g=jnp.ones((E,), jnp.float32), ln2_b=jnp.zeros((E,), jnp.float32),
            w1=w((E, F)), b1=w((F,)),
            w2=w((F, E)), b2=w((E,)),
        ))
    return params


def prepare_params(params, cfg):
    """Repack parameters into the kernel's fused / packed / bf16 layout."""
    E, F, V, L = (cfg["embedding_dim"], cfg["dim_ff"],
                  cfg["vocab_size"], cfg["prefill_size"])
    LV = max(E, F)

    def padlane(v, width):
        v = v.reshape(1, -1)
        return jnp.pad(v, ((0, 0), (0, width - v.shape[1])))

    wqkv, wo, w1, w2, lvec = [], [], [], [], []
    for blk in params["blocks"]:
        # Column layout of packed QKV: [q(E) | k(E) | v(E)], head h at h*hs:(h+1)*hs
        wqkv.append(jnp.concatenate([blk["wq"], blk["wk"], blk["wv"]], axis=-1))
        wo.append(blk["wo"])
        w1.append(blk["w1"])
        w2.append(blk["w2"])
        lvec.append(jnp.concatenate([
            padlane(blk["ln1_g"], LV), padlane(blk["ln1_b"], LV),
            padlane(blk["ln2_g"], LV), padlane(blk["ln2_b"], LV),
            padlane(blk["b2"], LV), padlane(blk["b1"], LV)], axis=0))   # (6, LV)

    fvec = jnp.concatenate([
        padlane(params["lnf_g"], VOCAB_PAD),
        padlane(params["lnf_b"], VOCAB_PAD),
        padlane(params["b_de"], VOCAB_PAD)], axis=0)                    # (3, 128)

    bf = jnp.bfloat16
    return dict(
        tok_table=params["tok_table"].astype(bf),                       # (V, E)
        pos=params["pos_table"][:L].astype(jnp.float32),                # (L, E)
        wqkv=jnp.stack(wqkv, 0).astype(bf),                             # (NL, E, 3E)
        wo=jnp.stack(wo, 0).astype(bf),                                 # (NL, E, E)
        w1=jnp.stack(w1, 0).astype(bf),                                 # (NL, E, F)
        w2=jnp.stack(w2, 0).astype(bf),                                 # (NL, F, E)
        lvec=jnp.stack(lvec, 0).astype(jnp.float32),                    # (NL, 6, LV)
        w_de=jnp.pad(params["w_de"], ((0, 0), (0, VOCAB_PAD - V))).astype(bf),
        fvec=fvec.astype(jnp.float32),                                  # (3, 128)
    )


# ----------------------------------- main ------------------------------------
if __name__ == "__main__":
    key = jax.random.PRNGKey(0)
    k_params, k_idx = jax.random.split(key)

    params = init_params(k_params, CFG)
    kparams = prepare_params(params, CFG)

    idx = jax.random.randint(
        k_idx, (CFG["batch_size"], CFG["prefill_size"]), 0, CFG["vocab_size"],
        dtype=jnp.int32)

    logits = language_model_forward(idx, kparams, CFG)
    jax.block_until_ready(logits)

    assert logits.shape == (CFG["batch_size"], CFG["prefill_size"], CFG["vocab_size"])
    assert bool(jnp.all(jnp.isfinite(logits)))
    print("KERNEL_OK")
</pallas_src>

<mosaic_0001>
module attributes {stable_mosaic.version = 11 : i64} {
  func.func @lm_kernel(%arg0: i32, %arg1: memref<1x8x1xi32, #tpu.memory_space<vmem>>, %arg2: memref<64x32xbf16, #tpu.memory_space<vmem>>, %arg3: memref<8x32xf32, #tpu.memory_space<vmem>>, %arg4: memref<2x32x96xbf16, #tpu.memory_space<vmem>>, %arg5: memref<2x32x32xbf16, #tpu.memory_space<vmem>>, %arg6: memref<2x32x64xbf16, #tpu.memory_space<vmem>>, %arg7: memref<2x64x32xbf16, #tpu.memory_space<vmem>>, %arg8: memref<2x6x64xf32, #tpu.memory_space<vmem>>, %arg9: memref<32x128xbf16, #tpu.memory_space<vmem>>, %arg10: memref<3x128xf32, #tpu.memory_space<vmem>>, %arg11: memref<1x8x128xf32, #tpu.memory_space<vmem>>) attributes {dimension_semantics = [#tpu.dimension_semantics<parallel>], iteration_bounds = array<i64: 2>, scalar_prefetch = 0 : i64, scratch_operands = 0 : i64, tpu.core_type = #tpu.core_type<tc>, window_params = [{transform_indices = @transform_0, window_bounds = array<i64: 1, 8, 1>}, {pipeline_mode = #tpu.pipeline_mode<synchronous>, transform_indices = @transform_1, window_bounds = array<i64: 64, 32>}, {pipeline_mode = #tpu.pipeline_mode<synchronous>, transform_indices = @transform_2, window_bounds = array<i64: 8, 32>}, {pipeline_mode = #tpu.pipeline_mode<synchronous>, transform_indices = @transform_3, window_bounds = array<i64: 2, 32, 96>}, {pipeline_mode = #tpu.pipeline_mode<synchronous>, transform_indices = @transform_4, window_bounds = array<i64: 2, 32, 32>}, {pipeline_mode = #tpu.pipeline_mode<synchronous>, transform_indices = @transform_5, window_bounds = array<i64: 2, 32, 64>}, {pipeline_mode = #tpu.pipeline_mode<synchronous>, transform_indices = @transform_6, window_bounds = array<i64: 2, 64, 32>}, {pipeline_mode = #tpu.pipeline_mode<synchronous>, transform_indices = @transform_7, window_bounds = array<i64: 2, 6, 64>}, {pipeline_mode = #tpu.pipeline_mode<synchronous>, transform_indices = @transform_8, window_bounds = array<i64: 32, 128>}, {pipeline_mode = #tpu.pipeline_mode<synchronous>, transform_indices = @transform_9, window_bounds = array<i64: 3, 128>}, {transform_indices = @transform_10, window_bounds = array<i64: 1, 8, 128>}]} {
    %c0 = arith.constant 0 : index
    %c0_0 = arith.constant 0 : index
    %c0_1 = arith.constant 0 : index
    %0 = vector.load %arg1[%c0, %c0_0, %c0_1] : memref<1x8x1xi32, #tpu.memory_space<vmem>>, vector<1x8x1xi32>
    %1 = vector.shape_cast %0 : vector<1x8x1xi32> to vector<8x1xi32>
    %2 = tpu.iota {dimensions = array<i32: 1>} : vector<8x64xi32>
    %3 = vector.broadcast %1 : vector<8x1xi32> to vector<8x64xi32>
    %4 = arith.cmpi eq, %3, %2 : vector<8x64xi32>
    %5 = arith.extui %4 : vector<8x64xi1> to vector<8x64xi32>
    %6 = arith.sitofp %5 : vector<8x64xi32> to vector<8x64xf32>
    %7 = arith.truncf %6 : vector<8x64xf32> to vector<8x64xbf16>
    %c0_2 = arith.constant 0 : index
    %c0_3 = arith.constant 0 : index
    %8 = vector.load %arg2[%c0_2, %c0_3] : memref<64x32xbf16, #tpu.memory_space<vmem>>, vector<64x32xbf16>
    %cst = arith.constant dense<0.000000e+00> : vector<8x32xf32>
    %9 = tpu.matmul %7, %8, %cst {dimension_numbers = #tpu.dot_dimension_numbers<[1], [0], [0], [1], [0, 0, 1, 1], [], []>} : vector<8x64xbf16>, vector<64x32xbf16>, vector<8x32xf32> -> vector<8x32xf32>
    %c0_4 = arith.constant 0 : index
    %c0_5 = arith.constant 0 : index
    %10 = vector.load %arg3[%c0_4, %c0_5] : memref<8x32xf32, #tpu.memory_space<vmem>>, vector<8x32xf32>
    %11 = arith.addf %9, %10 : vector<8x32xf32>
    %12 = tpu.iota {dimensions = array<i32: 0>} : vector<8x8xi32>
    %13 = tpu.iota {dimensions = array<i32: 1>} : vector<8x8xi32>
    %14 = arith.cmpi sge, %12, %13 : vector<8x8xi32>
    %cst_6 = arith.constant 0.000000e+00 : f32
    %cst_7 = arith.constant -1.000000e+30 : f32
    %15 = vector.broadcast %cst_6 : f32 to vector<8x8xf32>
    %16 = vector.broadcast %cst_7 : f32 to vector<8x8xf32>
    %17 = arith.select %14, %15, %16 : vector<8x8xi1>, vector<8x8xf32>
    %c0_8 = arith.constant 0 : index
    %c0_9 = arith.constant 0 : index
    %c0_10 = arith.constant 0 : index
    %18 = vector.load %arg8[%c0_8, %c0_9, %c0_10] : memref<2x6x64xf32, #tpu.memory_space<vmem>>, vector<1x6x64xf32>
    %19 = vector.shape_cast %18 : vector<1x6x64xf32> to vector<6x64xf32>
    %20 = vector.extract_strided_slice %19 {offsets = [0, 0], sizes = [1, 32], strides = [1, 1]} : vector<6x64xf32> to vector<1x32xf32>
    %21 = vector.extract_strided_slice %19 {offsets = [1, 0], sizes = [1, 32], strides = [1, 1]} : vector<6x64xf32> to vector<1x32xf32>
    %cst_11 = arith.constant dense<0.000000e+00> : vector<8xf32>
    %22 = vector.multi_reduction <add>, %11, %cst_11 [1] : vector<8x32xf32> to vector<8xf32>
    %23 = vector.shape_cast %22 : vector<8xf32> to vector<8x1xf32>
    %cst_12 = arith.constant 3.200000e+01 : f32
    %24 = vector.broadcast %cst_12 : f32 to vector<8x1xf32>
    %25 = arith.divf %23, %24 : vector<8x1xf32>
    %26 = vector.broadcast %25 : vector<8x1xf32> to vector<8x32xf32>
    %27 = arith.subf %11, %26 : vector<8x32xf32>
    %28 = arith.mulf %27, %27 : vector<8x32xf32>
    %cst_13 = arith.constant dense<0.000000e+00> : vector<8xf32>
    %29 = vector.multi_reduction <add>, %28, %cst_13 [1] : vector<8x32xf32> to vector<8xf32>
    %30 = vector.shape_cast %29 : vector<8xf32> to vector<8x1xf32>
    %cst_14 = arith.constant 3.200000e+01 : f32
    %31 = vector.broadcast %cst_14 : f32 to vector<8x1xf32>
    %32 = arith.divf %30, %31 : vector<8x1xf32>
    %33 = vector.broadcast %25 : vector<8x1xf32> to vector<8x32xf32>
    %34 = arith.subf %11, %33 : vector<8x32xf32>
    %cst_15 = arith.constant 9.99999974E-6 : f32
    %35 = vector.broadcast %cst_15 : f32 to vector<8x1xf32>
    %36 = arith.addf %32, %35 : vector<8x1xf32>
    %37 = math.rsqrt %36 : vector<8x1xf32>
    %38 = vector.broadcast %37 : vector<8x1xf32> to vector<8x32xf32>
    %39 = arith.mulf %34, %38 : vector<8x32xf32>
    %40 = vector.broadcast %20 : vector<1x32xf32> to vector<8x32xf32>
    %41 = arith.mulf %39, %40 : vector<8x32xf32>
    %42 = vector.broadcast %21 : vector<1x32xf32> to vector<8x32xf32>
    %43 = arith.addf %41, %42 : vector<8x32xf32>
    %44 = arith.truncf %43 : vector<8x32xf32> to vector<8x32xbf16>
    %c0_16 = arith.constant 0 : index
    %c0_17 = arith.constant 0 : index
    %c0_18 = arith.constant 0 : index
    %45 = vector.load %arg4[%c0_16, %c0_17, %c0_18] : memref<2x32x96xbf16, #tpu.memory_space<vmem>>, vector<1x32x96xbf16>
    %46 = vector.shape_cast %45 : vector<1x32x96xbf16> to vector<32x96xbf16>
    %cst_19 = arith.constant dense<0.000000e+00> : vector<8x96xf32>
    %47 = tpu.matmul %44, %46, %cst_19 {dimension_numbers = #tpu.dot_dimension_numbers<[1], [0], [0], [1], [0, 0, 1, 1], [], []>} : vector<8x32xbf16>, vector<32x96xbf16>, vector<8x96xf32> -> vector<8x96xf32>
    %48 = vector.extract_strided_slice %47 {offsets = [0, 0], sizes = [8, 8], strides = [1, 1]} : vector<8x96xf32> to vector<8x8xf32>
    %49 = vector.extract_strided_slice %47 {offsets = [0, 8], sizes = [8, 8], strides = [1, 1]} : vector<8x96xf32> to vector<8x8xf32>
    %50 = vector.extract_strided_slice %47 {offsets = [0, 16], sizes = [8, 8], strides = [1, 1]} : vector<8x96xf32> to vector<8x8xf32>
    %51 = vector.extract_strided_slice %47 {offsets = [0, 24], sizes = [8, 8], strides = [1, 1]} : vector<8x96xf32> to vector<8x8xf32>
    %52 = vector.shape_cast %48 : vector<8x8xf32> to vector<1x8x8xf32>
    %53 = vector.shape_cast %49 : vector<8x8xf32> to vector<1x8x8xf32>
    %54 = vector.shape_cast %50 : vector<8x8xf32> to vector<1x8x8xf32>
    %55 = vector.shape_cast %51 : vector<8x8xf32> to vector<1x8x8xf32>
    %56 = tpu.concatenate %52, %53, %54, %55 in 0 : vector<1x8x8xf32>, vector<1x8x8xf32>, vector<1x8x8xf32>, vector<1x8x8xf32> -> vector<4x8x8xf32>
    %57 = vector.extract_strided_slice %47 {offsets = [0, 32], sizes = [8, 8], strides = [1, 1]} : vector<8x96xf32> to vector<8x8xf32>
    %58 = vector.extract_strided_slice %47 {offsets = [0, 40], sizes = [8, 8], strides = [1, 1]} : vector<8x96xf32> to vector<8x8xf32>
    %59 = vector.extract_strided_slice %47 {offsets = [0, 48], sizes = [8, 8], strides = [1, 1]} : vector<8x96xf32> to vector<8x8xf32>
    %60 = vector.extract_strided_slice %47 {offsets = [0, 56], sizes = [8, 8], strides = [1, 1]} : vector<8x96xf32> to vector<8x8xf32>
    %61 = vector.shape_cast %57 : vector<8x8xf32> to vector<1x8x8xf32>
    %62 = vector.shape_cast %58 : vector<8x8xf32> to vector<1x8x8xf32>
    %63 = vector.shape_cast %59 : vector<8x8xf32> to vector<1x8x8xf32>
    %64 = vector.shape_cast %60 : vector<8x8xf32> to vector<1x8x8xf32>
    %65 = tpu.concatenate %61, %62, %63, %64 in 0 : vector<1x8x8xf32>, vector<1x8x8xf32>, vector<1x8x8xf32>, vector<1x8x8xf32> -> vector<4x8x8xf32>
    %66 = vector.extract_strided_slice %47 {offsets = [0, 64], sizes = [8, 8], strides = [1, 1]} : vector<8x96xf32> to vector<8x8xf32>
    %67 = vector.extract_strided_slice %47 {offsets = [0, 72], sizes = [8, 8], strides = [1, 1]} : vector<8x96xf32> to vector<8x8xf32>
    %68 = vector.extract_strided_slice %47 {offsets = [0, 80], sizes = [8, 8], strides = [1, 1]} : vector<8x96xf32> to vector<8x8xf32>
    %69 = vector.extract_strided_slice %47 {offsets = [0, 88], sizes = [8, 8], strides = [1, 1]} : vector<8x96xf32> to vector<8x8xf32>
    %70 = vector.shape_cast %66 : vector<8x8xf32> to vector<1x8x8xf32>
    %71 = vector.shape_cast %67 : vector<8x8xf32> to vector<1x8x8xf32>
    %72 = vector.shape_cast %68 : vector<8x8xf32> to vector<1x8x8xf32>
    %73 = vector.shape_cast %69 : vector<8x8xf32> to vector<1x8x8xf32>
    %74 = tpu.concatenate %70, %71, %72, %73 in 0 : vector<1x8x8xf32>, vector<1x8x8xf32>, vector<1x8x8xf32>, vector<1x8x8xf32> -> vector<4x8x8xf32>
    %75 = arith.truncf %56 : vector<4x8x8xf32> to vector<4x8x8xbf16>
    %76 = arith.truncf %65 : vector<4x8x8xf32> to vector<4x8x8xbf16>
    %77 = arith.truncf %74 : vector<4x8x8xf32> to vector<4x8x8xbf16>
    "tpu.trace_start"() <{level = 10 : i32, message = "nld,nmd->nlm"}> : () -> ()
    %cst_20 = arith.constant dense<0.000000e+00> : vector<4x8x8xf32>
    %78 = tpu.matmul %75, %76, %cst_20 {dimension_numbers = #tpu.dot_dimension_numbers<[2], [2], [1], [1], [0, 0, 0, 1, 1, 1], [0], [0]>} : vector<4x8x8xbf16>, vector<4x8x8xbf16>, vector<4x8x8xf32> -> vector<4x8x8xf32>
    "tpu.trace_stop"() : () -> ()
    %cst_21 = arith.constant 0.353553385 : f32
    %79 = vector.broadcast %cst_21 : f32 to vector<4x8x8xf32>
    %80 = arith.mulf %78, %79 : vector<4x8x8xf32>
    %81 = vector.shape_cast %17 : vector<8x8xf32> to vector<1x8x8xf32>
    %82 = vector.broadcast %81 : vector<1x8x8xf32> to vector<4x8x8xf32>
    %83 = arith.addf %80, %82 : vector<4x8x8xf32>
    %cst_22 = arith.constant dense<0xFF800000> : vector<4x8xf32>
    %84 = vector.multi_reduction <maximumf>, %83, %cst_22 [2] : vector<4x8x8xf32> to vector<4x8xf32>
    %85 = vector.shape_cast %84 : vector<4x8xf32> to vector<4x8x1xf32>
    %86 = vector.broadcast %85 : vector<4x8x1xf32> to vector<4x8x8xf32>
    %87 = arith.subf %83, %86 : vector<4x8x8xf32>
    %88 = math.exp %87 : vector<4x8x8xf32>
    %cst_23 = arith.constant dense<0.000000e+00> : vector<4x8xf32>
    %89 = vector.multi_reduction <add>, %88, %cst_23 [2] : vector<4x8x8xf32> to vector<4x8xf32>
    %90 = vector.shape_cast %89 : vector<4x8xf32> to vector<4x8x1xf32>
    %91 = tpu.reciprocal %90 {approx = true} : vector<4x8x1xf32> -> vector<4x8x1xf32>
    %92 = vector.broadcast %91 : vector<4x8x1xf32> to vector<4x8x8xf32>
    %93 = arith.mulf %88, %92 : vector<4x8x8xf32>
    %94 = arith.truncf %93 : vector<4x8x8xf32> to vector<4x8x8xbf16>
    "tpu.trace_start"() <{level = 10 : i32, message = "nlm,nmd->nld"}> : () -> ()
    %cst_24 = arith.constant dense<0.000000e+00> : vector<4x8x8xf32>
    %95 = tpu.matmul %94, %77, %cst_24 {dimension_numbers = #tpu.dot_dimension_numbers<[2], [1], [1], [2], [0, 0, 0, 1, 1, 2], [0], [0]>} : vector<4x8x8xbf16>, vector<4x8x8xbf16>, vector<4x8x8xf32> -> vector<4x8x8xf32>
    "tpu.trace_stop"() : () -> ()
    %96 = vector.extract_strided_slice %95 {offsets = [0, 0, 0], sizes = [1, 8, 8], strides = [1, 1, 1]} : vector<4x8x8xf32> to vector<1x8x8xf32>
    %97 = vector.shape_cast %96 : vector<1x8x8xf32> to vector<8x8xf32>
    %98 = vector.extract_strided_slice %95 {offsets = [1, 0, 0], sizes = [1, 8, 8], strides = [1, 1, 1]} : vector<4x8x8xf32> to vector<1x8x8xf32>
    %99 = vector.shape_cast %98 : vector<1x8x8xf32> to vector<8x8xf32>
    %100 = vector.extract_strided_slice %95 {offsets = [2, 0, 0], sizes = [1, 8, 8], strides = [1, 1, 1]} : vector<4x8x8xf32> to vector<1x8x8xf32>
    %101 = vector.shape_cast %100 : vector<1x8x8xf32> to vector<8x8xf32>
    %102 = vector.extract_strided_slice %95 {offsets = [3, 0, 0], sizes = [1, 8, 8], strides = [1, 1, 1]} : vector<4x8x8xf32> to vector<1x8x8xf32>
    %103 = vector.shape_cast %102 : vector<1x8x8xf32> to vector<8x8xf32>
    %104 = tpu.concatenate %97, %99, %101, %103 in 1 : vector<8x8xf32>, vector<8x8xf32>, vector<8x8xf32>, vector<8x8xf32> -> vector<8x32xf32>
    %105 = arith.truncf %104 : vector<8x32xf32> to vector<8x32xbf16>
    %c0_25 = arith.constant 0 : index
    %c0_26 = arith.constant 0 : index
    %c0_27 = arith.constant 0 : index
    %106 = vector.load %arg5[%c0_25, %c0_26, %c0_27] : memref<2x32x32xbf16, #tpu.memory_space<vmem>>, vector<1x32x32xbf16>
    %107 = vector.shape_cast %106 : vector<1x32x32xbf16> to vector<32x32xbf16>
    %cst_28 = arith.constant dense<0.000000e+00> : vector<8x32xf32>
    %108 = tpu.matmul %105, %107, %cst_28 {dimension_numbers = #tpu.dot_dimension_numbers<[1], [0], [0], [1], [0, 0, 1, 1], [], []>} : vector<8x32xbf16>, vector<32x32xbf16>, vector<8x32xf32> -> vector<8x32xf32>
    %109 = arith.addf %11, %108 : vector<8x32xf32>
    %110 = vector.extract_strided_slice %19 {offsets = [2, 0], sizes = [1, 32], strides = [1, 1]} : vector<6x64xf32> to vector<1x32xf32>
    %111 = vector.extract_strided_slice %19 {offsets = [3, 0], sizes = [1, 32], strides = [1, 1]} : vector<6x64xf32> to vector<1x32xf32>
    %cst_29 = arith.constant dense<0.000000e+00> : vector<8xf32>
    %112 = vector.multi_reduction <add>, %109, %cst_29 [1] : vector<8x32xf32> to vector<8xf32>
    %113 = vector.shape_cast %112 : vector<8xf32> to vector<8x1xf32>
    %cst_30 = arith.constant 3.200000e+01 : f32
    %114 = vector.broadcast %cst_30 : f32 to vector<8x1xf32>
    %115 = arith.divf %113, %114 : vector<8x1xf32>
    %116 = vector.broadcast %115 : vector<8x1xf32> to vector<8x32xf32>
    %117 = arith.subf %109, %116 : vector<8x32xf32>
    %118 = arith.mulf %117, %117 : vector<8x32xf32>
    %cst_31 = arith.constant dense<0.000000e+00> : vector<8xf32>
    %119 = vector.multi_reduction <add>, %118, %cst_31 [1] : vector<8x32xf32> to vector<8xf32>
    %120 = vector.shape_cast %119 : vector<8xf32> to vector<8x1xf32>
    %cst_32 = arith.constant 3.200000e+01 : f32
    %121 = vector.broadcast %cst_32 : f32 to vector<8x1xf32>
    %122 = arith.divf %120, %121 : vector<8x1xf32>
    %123 = vector.broadcast %115 : vector<8x1xf32> to vector<8x32xf32>
    %124 = arith.subf %109, %123 : vector<8x32xf32>
    %cst_33 = arith.constant 9.99999974E-6 : f32
    %125 = vector.broadcast %cst_33 : f32 to vector<8x1xf32>
    %126 = arith.addf %122, %125 : vector<8x1xf32>
    %127 = math.rsqrt %126 : vector<8x1xf32>
    %128 = vector.broadcast %127 : vector<8x1xf32> to vector<8x32xf32>
    %129 = arith.mulf %124, %128 : vector<8x32xf32>
    %130 = vector.broadcast %110 : vector<1x32xf32> to vector<8x32xf32>
    %131 = arith.mulf %129, %130 : vector<8x32xf32>
    %132 = vector.broadcast %111 : vector<1x32xf32> to vector<8x32xf32>
    %133 = arith.addf %131, %132 : vector<8x32xf32>
    %134 = arith.truncf %133 : vector<8x32xf32> to vector<8x32xbf16>
    %c0_34 = arith.constant 0 : index
    %c0_35 = arith.constant 0 : index
    %c0_36 = arith.constant 0 : index
    %135 = vector.load %arg6[%c0_34, %c0_35, %c0_36] : memref<2x32x64xbf16, #tpu.memory_space<vmem>>, vector<1x32x64xbf16>
    %136 = vector.shape_cast %135 : vector<1x32x64xbf16> to vector<32x64xbf16>
    %cst_37 = arith.constant dense<0.000000e+00> : vector<8x64xf32>
    %137 = tpu.matmul %134, %136, %cst_37 {dimension_numbers = #tpu.dot_dimension_numbers<[1], [0], [0], [1], [0, 0, 1, 1], [], []>} : vector<8x32xbf16>, vector<32x64xbf16>, vector<8x64xf32> -> vector<8x64xf32>
    %138 = vector.extract_strided_slice %19 {offsets = [5, 0], sizes = [1, 64], strides = [1, 1]} : vector<6x64xf32> to vector<1x64xf32>
    %139 = vector.broadcast %138 : vector<1x64xf32> to vector<8x64xf32>
    %140 = arith.addf %137, %139 : vector<8x64xf32>
    %cst_38 = arith.constant 0.000000e+00 : f32
    %141 = vector.broadcast %cst_38 : f32 to vector<8x64xf32>
    %142 = arith.maximumf %140, %141 : vector<8x64xf32>
    %143 = arith.truncf %142 : vector<8x64xf32> to vector<8x64xbf16>
    %c0_39 = arith.constant 0 : index
    %c0_40 = arith.constant 0 : index
    %c0_41 = arith.constant 0 : index
    %144 = vector.load %arg7[%c0_39, %c0_40, %c0_41] : memref<2x64x32xbf16, #tpu.memory_space<vmem>>, vector<1x64x32xbf16>
    %145 = vector.shape_cast %144 : vector<1x64x32xbf16> to vector<64x32xbf16>
    %cst_42 = arith.constant dense<0.000000e+00> : vector<8x32xf32>
    %146 = tpu.matmul %143, %145, %cst_42 {dimension_numbers = #tpu.dot_dimension_numbers<[1], [0], [0], [1], [0, 0, 1, 1], [], []>} : vector<8x64xbf16>, vector<64x32xbf16>, vector<8x32xf32> -> vector<8x32xf32>
    %147 = vector.extract_strided_slice %19 {offsets = [4, 0], sizes = [1, 32], strides = [1, 1]} : vector<6x64xf32> to vector<1x32xf32>
    %148 = vector.broadcast %147 : vector<1x32xf32> to vector<8x32xf32>
    %149 = arith.addf %146, %148 : vector<8x32xf32>
    %150 = arith.addf %109, %149 : vector<8x32xf32>
    %c1 = arith.constant 1 : index
    %c0_43 = arith.constant 0 : index
    %c0_44 = arith.constant 0 : index
    %151 = vector.load %arg8[%c1, %c0_43, %c0_44] : memref<2x6x64xf32, #tpu.memory_space<vmem>>, vector<1x6x64xf32>
    %152 = vector.shape_cast %151 : vector<1x6x64xf32> to vector<6x64xf32>
    %153 = vector.extract_strided_slice %152 {offsets = [0, 0], sizes = [1, 32], strides = [1, 1]} : vector<6x64xf32> to vector<1x32xf32>
    %154 = vector.extract_strided_slice %152 {offsets = [1, 0], sizes = [1, 32], strides = [1, 1]} : vector<6x64xf32> to vector<1x32xf32>
    %cst_45 = arith.constant dense<0.000000e+00> : vector<8xf32>
    %155 = vector.multi_reduction <add>, %150, %cst_45 [1] : vector<8x32xf32> to vector<8xf32>
    %156 = vector.shape_cast %155 : vector<8xf32> to vector<8x1xf32>
    %cst_46 = arith.constant 3.200000e+01 : f32
    %157 = vector.broadcast %cst_46 : f32 to vector<8x1xf32>
    %158 = arith.divf %156, %157 : vector<8x1xf32>
    %159 = vector.broadcast %158 : vector<8x1xf32> to vector<8x32xf32>
    %160 = arith.subf %150, %159 : vector<8x32xf32>
    %161 = arith.mulf %160, %160 : vector<8x32xf32>
    %cst_47 = arith.constant dense<0.000000e+00> : vector<8xf32>
    %162 = vector.multi_reduction <add>, %161, %cst_47 [1] : vector<8x32xf32> to vector<8xf32>
    %163 = vector.shape_cast %162 : vector<8xf32> to vector<8x1xf32>
    %cst_48 = arith.constant 3.200000e+01 : f32
    %164 = vector.broadcast %cst_48 : f32 to vector<8x1xf32>
    %165 = arith.divf %163, %164 : vector<8x1xf32>
    %166 = vector.broadcast %158 : vector<8x1xf32> to vector<8x32xf32>
    %167 = arith.subf %150, %166 : vector<8x32xf32>
    %cst_49 = arith.constant 9.99999974E-6 : f32
    %168 = vector.broadcast %cst_49 : f32 to vector<8x1xf32>
    %169 = arith.addf %165, %168 : vector<8x1xf32>
    %170 = math.rsqrt %169 : vector<8x1xf32>
    %171 = vector.broadcast %170 : vector<8x1xf32> to vector<8x32xf32>
    %172 = arith.mulf %167, %171 : vector<8x32xf32>
    %173 = vector.broadcast %153 : vector<1x32xf32> to vector<8x32xf32>
    %174 = arith.mulf %172, %173 : vector<8x32xf32>
    %175 = vector.broadcast %154 : vector<1x32xf32> to vector<8x32xf32>
    %176 = arith.addf %174, %175 : vector<8x32xf32>
    %177 = arith.truncf %176 : vector<8x32xf32> to vector<8x32xbf16>
    %c1_50 = arith.constant 1 : index
    %c0_51 = arith.constant 0 : index
    %c0_52 = arith.constant 0 : index
    %178 = vector.load %arg4[%c1_50, %c0_51, %c0_52] : memref<2x32x96xbf16, #tpu.memory_space<vmem>>, vector<1x32x96xbf16>
    %179 = vector.shape_cast %178 : vector<1x32x96xbf16> to vector<32x96xbf16>
    %cst_53 = arith.constant dense<0.000000e+00> : vector<8x96xf32>
    %180 = tpu.matmul %177, %179, %cst_53 {dimension_numbers = #tpu.dot_dimension_numbers<[1], [0], [0], [1], [0, 0, 1, 1], [], []>} : vector<8x32xbf16>, vector<32x96xbf16>, vector<8x96xf32> -> vector<8x96xf32>
    %181 = vector.extract_strided_slice %180 {offsets = [0, 0], sizes = [8, 8], strides = [1, 1]} : vector<8x96xf32> to vector<8x8xf32>
    %182 = vector.extract_strided_slice %180 {offsets = [0, 8], sizes = [8, 8], strides = [1, 1]} : vector<8x96xf32> to vector<8x8xf32>
    %183 = vector.extract_strided_slice %180 {offsets = [0, 16], sizes = [8, 8], strides = [1, 1]} : vector<8x96xf32> to vector<8x8xf32>
    %184 = vector.extract_strided_slice %180 {offsets = [0, 24], sizes = [8, 8], strides = [1, 1]} : vector<8x96xf32> to vector<8x8xf32>
    %185 = vector.shape_cast %181 : vector<8x8xf32> to vector<1x8x8xf32>
    %186 = vector.shape_cast %182 : vector<8x8xf32> to vector<1x8x8xf32>
    %187 = vector.shape_cast %183 : vector<8x8xf32> to vector<1x8x8xf32>
    %188 = vector.shape_cast %184 : vector<8x8xf32> to vector<1x8x8xf32>
    %189 = tpu.concatenate %185, %186, %187, %188 in 0 : vector<1x8x8xf32>, vector<1x8x8xf32>, vector<1x8x8xf32>, vector<1x8x8xf32> -> vector<4x8x8xf32>
    %190 = vector.extract_strided_slice %180 {offsets = [0, 32], sizes = [8, 8], strides = [1, 1]} : vector<8x96xf32> to vector<8x8xf32>
    %191 = vector.extract_strided_slice %180 {offsets = [0, 40], sizes = [8, 8], strides = [1, 1]} : vector<8x96xf32> to vector<8x8xf32>
    %192 = vector.extract_strided_slice %180 {offsets = [0, 48], sizes = [8, 8], strides = [1, 1]} : vector<8x96xf32> to vector<8x8xf32>
    %193 = vector.extract_strided_slice %180 {offsets = [0, 56], sizes = [8, 8], strides = [1, 1]} : vector<8x96xf32> to vector<8x8xf32>
    %194 = vector.shape_cast %190 : vector<8x8xf32> to vector<1x8x8xf32>
    %195 = vector.shape_cast %191 : vector<8x8xf32> to vector<1x8x8xf32>
    %196 = vector.shape_cast %192 : vector<8x8xf32> to vector<1x8x8xf32>
    %197 = vector.shape_cast %193 : vector<8x8xf32> to vector<1x8x8xf32>
    %198 = tpu.concatenate %194, %195, %196, %197 in 0 : vector<1x8x8xf32>, vector<1x8x8xf32>, vector<1x8x8xf32>, vector<1x8x8xf32> -> vector<4x8x8xf32>
    %199 = vector.extract_strided_slice %180 {offsets = [0, 64], sizes = [8, 8], strides = [1, 1]} : vector<8x96xf32> to vector<8x8xf32>
    %200 = vector.extract_strided_slice %180 {offsets = [0, 72], sizes = [8, 8], strides = [1, 1]} : vector<8x96xf32> to vector<8x8xf32>
    %201 = vector.extract_strided_slice %180 {offsets = [0, 80], sizes = [8, 8], strides = [1, 1]} : vector<8x96xf32> to vector<8x8xf32>
    %202 = vector.extract_strided_slice %180 {offsets = [0, 88], sizes = [8, 8], strides = [1, 1]} : vector<8x96xf32> to vector<8x8xf32>
    %203 = vector.shape_cast %199 : vector<8x8xf32> to vector<1x8x8xf32>
    %204 = vector.shape_cast %200 : vector<8x8xf32> to vector<1x8x8xf32>
    %205 = vector.shape_cast %201 : vector<8x8xf32> to vector<1x8x8xf32>
    %206 = vector.shape_cast %202 : vector<8x8xf32> to vector<1x8x8xf32>
    %207 = tpu.concatenate %203, %204, %205, %206 in 0 : vector<1x8x8xf32>, vector<1x8x8xf32>, vector<1x8x8xf32>, vector<1x8x8xf32> -> vector<4x8x8xf32>
    %208 = arith.truncf %189 : vector<4x8x8xf32> to vector<4x8x8xbf16>
    %209 = arith.truncf %198 : vector<4x8x8xf32> to vector<4x8x8xbf16>
    %210 = arith.truncf %207 : vector<4x8x8xf32> to vector<4x8x8xbf16>
    "tpu.trace_start"() <{level = 10 : i32, message = "nld,nmd->nlm"}> : () -> ()
    %cst_54 = arith.constant dense<0.000000e+00> : vector<4x8x8xf32>
    %211 = tpu.matmul %208, %209, %cst_54 {dimension_numbers = #tpu.dot_dimension_numbers<[2], [2], [1], [1], [0, 0, 0, 1, 1, 1], [0], [0]>} : vector<4x8x8xbf16>, vector<4x8x8xbf16>, vector<4x8x8xf32> -> vector<4x8x8xf32>
    "tpu.trace_stop"() : () -> ()
    %cst_55 = arith.constant 0.353553385 : f32
    %212 = vector.broadcast %cst_55 : f32 to vector<4x8x8xf32>
    %213 = arith.mulf %211, %212 : vector<4x8x8xf32>
    %214 = vector.shape_cast %17 : vector<8x8xf32> to vector<1x8x8xf32>
    %215 = vector.broadcast %214 : vector<1x8x8xf32> to vector<4x8x8xf32>
    %216 = arith.addf %213, %215 : vector<4x8x8xf32>
    %cst_56 = arith.constant dense<0xFF800000> : vector<4x8xf32>
    %217 = vector.multi_reduction <maximumf>, %216, %cst_56 [2] : vector<4x8x8xf32> to vector<4x8xf32>
    %218 = vector.shape_cast %217 : vector<4x8xf32> to vector<4x8x1xf32>
    %219 = vector.broadcast %218 : vector<4x8x1xf32> to vector<4x8x8xf32>
    %220 = arith.subf %216, %219 : vector<4x8x8xf32>
    %221 = math.exp %220 : vector<4x8x8xf32>
    %cst_57 = arith.constant dense<0.000000e+00> : vector<4x8xf32>
    %222 = vector.multi_reduction <add>, %221, %cst_57 [2] : vector<4x8x8xf32> to vector<4x8xf32>
    %223 = vector.shape_cast %222 : vector<4x8xf32> to vector<4x8x1xf32>
    %224 = tpu.reciprocal %223 {approx = true} : vector<4x8x1xf32> -> vector<4x8x1xf32>
    %225 = vector.broadcast %224 : vector<4x8x1xf32> to vector<4x8x8xf32>
    %226 = arith.mulf %221, %225 : vector<4x8x8xf32>
    %227 = arith.truncf %226 : vector<4x8x8xf32> to vector<4x8x8xbf16>
    "tpu.trace_start"() <{level = 10 : i32, message = "nlm,nmd->nld"}> : () -> ()
    %cst_58 = arith.constant dense<0.000000e+00> : vector<4x8x8xf32>
    %228 = tpu.matmul %227, %210, %cst_58 {dimension_numbers = #tpu.dot_dimension_numbers<[2], [1], [1], [2], [0, 0, 0, 1, 1, 2], [0], [0]>} : vector<4x8x8xbf16>, vector<4x8x8xbf16>, vector<4x8x8xf32> -> vector<4x8x8xf32>
    "tpu.trace_stop"() : () -> ()
    %229 = vector.extract_strided_slice %228 {offsets = [0, 0, 0], sizes = [1, 8, 8], strides = [1, 1, 1]} : vector<4x8x8xf32> to vector<1x8x8xf32>
    %230 = vector.shape_cast %229 : vector<1x8x8xf32> to vector<8x8xf32>
    %231 = vector.extract_strided_slice %228 {offsets = [1, 0, 0], sizes = [1, 8, 8], strides = [1, 1, 1]} : vector<4x8x8xf32> to vector<1x8x8xf32>
    %232 = vector.shape_cast %231 : vector<1x8x8xf32> to vector<8x8xf32>
    %233 = vector.extract_strided_slice %228 {offsets = [2, 0, 0], sizes = [1, 8, 8], strides = [1, 1, 1]} : vector<4x8x8xf32> to vector<1x8x8xf32>
    %234 = vector.shape_cast %233 : vector<1x8x8xf32> to vector<8x8xf32>
    %235 = vector.extract_strided_slice %228 {offsets = [3, 0, 0], sizes = [1, 8, 8], strides = [1, 1, 1]} : vector<4x8x8xf32> to vector<1x8x8xf32>
    %236 = vector.shape_cast %235 : vector<1x8x8xf32> to vector<8x8xf32>
    %237 = tpu.concatenate %230, %232, %234, %236 in 1 : vector<8x8xf32>, vector<8x8xf32>, vector<8x8xf32>, vector<8x8xf32> -> vector<8x32xf32>
    %238 = arith.truncf %237 : vector<8x32xf32> to vector<8x32xbf16>
    %c1_59 = arith.constant 1 : index
    %c0_60 = arith.constant 0 : index
    %c0_61 = arith.constant 0 : index
    %239 = vector.load %arg5[%c1_59, %c0_60, %c0_61] : memref<2x32x32xbf16, #tpu.memory_space<vmem>>, vector<1x32x32xbf16>
    %240 = vector.shape_cast %239 : vector<1x32x32xbf16> to vector<32x32xbf16>
    %cst_62 = arith.constant dense<0.000000e+00> : vector<8x32xf32>
    %241 = tpu.matmul %238, %240, %cst_62 {dimension_numbers = #tpu.dot_dimension_numbers<[1], [0], [0], [1], [0, 0, 1, 1], [], []>} : vector<8x32xbf16>, vector<32x32xbf16>, vector<8x32xf32> -> vector<8x32xf32>
    %242 = arith.addf %150, %241 : vector<8x32xf32>
    %243 = vector.extract_strided_slice %152 {offsets = [2, 0], sizes = [1, 32], strides = [1, 1]} : vector<6x64xf32> to vector<1x32xf32>
    %244 = vector.extract_strided_slice %152 {offsets = [3, 0], sizes = [1, 32], strides = [1, 1]} : vector<6x64xf32> to vector<1x32xf32>
    %cst_63 = arith.constant dense<0.000000e+00> : vector<8xf32>
    %245 = vector.multi_reduction <add>, %242, %cst_63 [1] : vector<8x32xf32> to vector<8xf32>
    %246 = vector.shape_cast %245 : vector<8xf32> to vector<8x1xf32>
    %cst_64 = arith.constant 3.200000e+01 : f32
    %247 = vector.broadcast %cst_64 : f32 to vector<8x1xf32>
    %248 = arith.divf %246, %247 : vector<8x1xf32>
    %249 = vector.broadcast %248 : vector<8x1xf32> to vector<8x32xf32>
    %250 = arith.subf %242, %249 : vector<8x32xf32>
    %251 = arith.mulf %250, %250 : vector<8x32xf32>
    %cst_65 = arith.constant dense<0.000000e+00> : vector<8xf32>
    %252 = vector.multi_reduction <add>, %251, %cst_65 [1] : vector<8x32xf32> to vector<8xf32>
    %253 = vector.shape_cast %252 : vector<8xf32> to vector<8x1xf32>
    %cst_66 = arith.constant 3.200000e+01 : f32
    %254 = vector.broadcast %cst_66 : f32 to vector<8x1xf32>
    %255 = arith.divf %253, %254 : vector<8x1xf32>
    %256 = vector.broadcast %248 : vector<8x1xf32> to vector<8x32xf32>
    %257 = arith.subf %242, %256 : vector<8x32xf32>
    %cst_67 = arith.constant 9.99999974E-6 : f32
    %258 = vector.broadcast %cst_67 : f32 to vector<8x1xf32>
    %259 = arith.addf %255, %258 : vector<8x1xf32>
    %260 = math.rsqrt %259 : vector<8x1xf32>
    %261 = vector.broadcast %260 : vector<8x1xf32> to vector<8x32xf32>
    %262 = arith.mulf %257, %261 : vector<8x32xf32>
    %263 = vector.broadcast %243 : vector<1x32xf32> to vector<8x32xf32>
    %264 = arith.mulf %262, %263 : vector<8x32xf32>
    %265 = vector.broadcast %244 : vector<1x32xf32> to vector<8x32xf32>
    %266 = arith.addf %264, %265 : vector<8x32xf32>
    %267 = arith.truncf %266 : vector<8x32xf32> to vector<8x32xbf16>
    %c1_68 = arith.constant 1 : index
    %c0_69 = arith.constant 0 : index
    %c0_70 = arith.constant 0 : index
    %268 = vector.load %arg6[%c1_68, %c0_69, %c0_70] : memref<2x32x64xbf16, #tpu.memory_space<vmem>>, vector<1x32x64xbf16>
    %269 = vector.shape_cast %268 : vector<1x32x64xbf16> to vector<32x64xbf16>
    %cst_71 = arith.constant dense<0.000000e+00> : vector<8x64xf32>
    %270 = tpu.matmul %267, %269, %cst_71 {dimension_numbers = #tpu.dot_dimension_numbers<[1], [0], [0], [1], [0, 0, 1, 1], [], []>} : vector<8x32xbf16>, vector<32x64xbf16>, vector<8x64xf32> -> vector<8x64xf32>
    %271 = vector.extract_strided_slice %152 {offsets = [5, 0], sizes = [1, 64], strides = [1, 1]} : vector<6x64xf32> to vector<1x64xf32>
    %272 = vector.broadcast %271 : vector<1x64xf32> to vector<8x64xf32>
    %273 = arith.addf %270, %272 : vector<8x64xf32>
    %cst_72 = arith.constant 0.000000e+00 : f32
    %274 = vector.broadcast %cst_72 : f32 to vector<8x64xf32>
    %275 = arith.maximumf %273, %274 : vector<8x64xf32>
    %276 = arith.truncf %275 : vector<8x64xf32> to vector<8x64xbf16>
    %c1_73 = arith.constant 1 : index
    %c0_74 = arith.constant 0 : index
    %c0_75 = arith.constant 0 : index
    %277 = vector.load %arg7[%c1_73, %c0_74, %c0_75] : memref<2x64x32xbf16, #tpu.memory_space<vmem>>, vector<1x64x32xbf16>
    %278 = vector.shape_cast %277 : vector<1x64x32xbf16> to vector<64x32xbf16>
    %cst_76 = arith.constant dense<0.000000e+00> : vector<8x32xf32>
    %279 = tpu.matmul %276, %278, %cst_76 {dimension_numbers = #tpu.dot_dimension_numbers<[1], [0], [0], [1], [0, 0, 1, 1], [], []>} : vector<8x64xbf16>, vector<64x32xbf16>, vector<8x32xf32> -> vector<8x32xf32>
    %280 = vector.extract_strided_slice %152 {offsets = [4, 0], sizes = [1, 32], strides = [1, 1]} : vector<6x64xf32> to vector<1x32xf32>
    %281 = vector.broadcast %280 : vector<1x32xf32> to vector<8x32xf32>
    %282 = arith.addf %279, %281 : vector<8x32xf32>
    %283 = arith.addf %242, %282 : vector<8x32xf32>
    %c0_77 = arith.constant 0 : index
    %c0_78 = arith.constant 0 : index
    %284 = vector.load %arg10[%c0_77, %c0_78] : memref<3x128xf32, #tpu.memory_space<vmem>>, vector<1x32xf32>
    %c1_79 = arith.constant 1 : index
    %c0_80 = arith.constant 0 : index
    %285 = vector.load %arg10[%c1_79, %c0_80] : memref<3x128xf32, #tpu.memory_space<vmem>>, vector<1x32xf32>
    %cst_81 = arith.constant dense<0.000000e+00> : vector<8xf32>
    %286 = vector.multi_reduction <add>, %283, %cst_81 [1] : vector<8x32xf32> to vector<8xf32>
    %287 = vector.shape_cast %286 : vector<8xf32> to vector<8x1xf32>
    %cst_82 = arith.constant 3.200000e+01 : f32
    %288 = vector.broadcast %cst_82 : f32 to vector<8x1xf32>
    %289 = arith.divf %287, %288 : vector<8x1xf32>
    %290 = vector.broadcast %289 : vector<8x1xf32> to vector<8x32xf32>
    %291 = arith.subf %283, %290 : vector<8x32xf32>
    %292 = arith.mulf %291, %291 : vector<8x32xf32>
    %cst_83 = arith.constant dense<0.000000e+00> : vector<8xf32>
    %293 = vector.multi_reduction <add>, %292, %cst_83 [1] : vector<8x32xf32> to vector<8xf32>
    %294 = vector.shape_cast %293 : vector<8xf32> to vector<8x1xf32>
    %cst_84 = arith.constant 3.200000e+01 : f32
    %295 = vector.broadcast %cst_84 : f32 to vector<8x1xf32>
    %296 = arith.divf %294, %295 : vector<8x1xf32>
    %297 = vector.broadcast %289 : vector<8x1xf32> to vector<8x32xf32>
    %298 = arith.subf %283, %297 : vector<8x32xf32>
    %cst_85 = arith.constant 9.99999974E-6 : f32
    %299 = vector.broadcast %cst_85 : f32 to vector<8x1xf32>
    %300 = arith.addf %296, %299 : vector<8x1xf32>
    %301 = math.rsqrt %300 : vector<8x1xf32>
    %302 = vector.broadcast %301 : vector<8x1xf32> to vector<8x32xf32>
    %303 = arith.mulf %298, %302 : vector<8x32xf32>
    %304 = vector.broadcast %284 : vector<1x32xf32> to vector<8x32xf32>
    %305 = arith.mulf %303, %304 : vector<8x32xf32>
    %306 = vector.broadcast %285 : vector<1x32xf32> to vector<8x32xf32>
    %307 = arith.addf %305, %306 : vector<8x32xf32>
    %308 = arith.truncf %307 : vector<8x32xf32> to vector<8x32xbf16>
    %c0_86 = arith.constant 0 : index
    %c0_87 = arith.constant 0 : index
    %309 = vector.load %arg9[%c0_86, %c0_87] : memref<32x128xbf16, #tpu.memory_space<vmem>>, vector<32x128xbf16>
    %cst_88 = arith.constant dense<0.000000e+00> : vector<8x128xf32>
    %310 = tpu.matmul %308, %309, %cst_88 {dimension_numbers = #tpu.dot_dimension_numbers<[1], [0], [0], [1], [0, 0, 1, 1], [], []>} : vector<8x32xbf16>, vector<32x128xbf16>, vector<8x128xf32> -> vector<8x128xf32>
    %c2 = arith.constant 2 : index
    %c0_89 = arith.constant 0 : index
    %311 = vector.load %arg10[%c2, %c0_89] : memref<3x128xf32, #tpu.memory_space<vmem>>, vector<1x128xf32>
    %312 = vector.broadcast %311 : vector<1x128xf32> to vector<8x128xf32>
    %313 = arith.addf %310, %312 : vector<8x128xf32>
    %c0_90 = arith.constant 0 : index
    %c0_91 = arith.constant 0 : index
    %c0_92 = arith.constant 0 : index
    %314 = vector.load %arg11[%c0_90, %c0_91, %c0_92] : memref<1x8x128xf32, #tpu.memory_space<vmem>>, vector<1x8x128xf32>
    %315 = vector.shape_cast %314 : vector<1x8x128xf32> to vector<8x128xf32>
    %316 = vector.shape_cast %313 : vector<8x128xf32> to vector<1x8x128xf32>
    tpu.vector_store %arg11[%c0_90, %c0_91, %c0_92], %316 {strides = array<i32>} : memref<1x8x128xf32, #tpu.memory_space<vmem>>, vector<1x8x128xf32>,
    return
  }
  func.func @transform_0(%arg0: i32) -> (i32, i32, i32) {
    %c0_i32 = arith.constant 0 : i32
    %c0_i32_0 = arith.constant 0 : i32
    %c0_i32_1 = arith.constant 0 : i32
    return %arg0, %c0_i32, %c0_i32_0 : i32, i32, i32
  }
  func.func @transform_1(%arg0: i32) -> (i32, i32) {
    %c0_i32 = arith.constant 0 : i32
    %c0_i32_0 = arith.constant 0 : i32
    %c0_i32_1 = arith.constant 0 : i32
    return %c0_i32, %c0_i32_0 : i32, i32
  }
  func.func @transform_2(%arg0: i32) -> (i32, i32) {
    %c0_i32 = arith.constant 0 : i32
    %c0_i32_0 = arith.constant 0 : i32
    %c0_i32_1 = arith.constant 0 : i32
    return %c0_i32, %c0_i32_0 : i32, i32
  }
  func.func @transform_3(%arg0: i32) -> (i32, i32, i32) {
    %c0_i32 = arith.constant 0 : i32
    %c0_i32_0 = arith.constant 0 : i32
    %c0_i32_1 = arith.constant 0 : i32
    %c0_i32_2 = arith.constant 0 : i32
    return %c0_i32, %c0_i32_0, %c0_i32_1 : i32, i32, i32
  }
  func.func @transform_4(%arg0: i32) -> (i32, i32, i32) {
    %c0_i32 = arith.constant 0 : i32
    %c0_i32_0 = arith.constant 0 : i32
    %c0_i32_1 = arith.constant 0 : i32
    %c0_i32_2 = arith.constant 0 : i32
    return %c0_i32, %c0_i32_0, %c0_i32_1 : i32, i32, i32
  }
  func.func @transform_5(%arg0: i32) -> (i32, i32, i32) {
    %c0_i32 = arith.constant 0 : i32
    %c0_i32_0 = arith.constant 0 : i32
    %c0_i32_1 = arith.constant 0 : i32
    %c0_i32_2 = arith.constant 0 : i32
    return %c0_i32, %c0_i32_0, %c0_i32_1 : i32, i32, i32
  }
  func.func @transform_6(%arg0: i32) -> (i32, i32, i32) {
    %c0_i32 = arith.constant 0 : i32
    %c0_i32_0 = arith.constant 0 : i32
    %c0_i32_1 = arith.constant 0 : i32
    %c0_i32_2 = arith.constant 0 : i32
    return %c0_i32, %c0_i32_0, %c0_i32_1 : i32, i32, i32
  }
  func.func @transform_7(%arg0: i32) -> (i32, i32, i32) {
    %c0_i32 = arith.constant 0 : i32
    %c0_i32_0 = arith.constant 0 : i32
    %c0_i32_1 = arith.constant 0 : i32
    %c0_i32_2 = arith.constant 0 : i32
    return %c0_i32, %c0_i32_0, %c0_i32_1 : i32, i32, i32
  }
  func.func @transform_8(%arg0: i32) -> (i32, i32) {
    %c0_i32 = arith.constant 0 : i32
    %c0_i32_0 = arith.constant 0 : i32
    %c0_i32_1 = arith.constant 0 : i32
    return %c0_i32, %c0_i32_0 : i32, i32
  }
  func.func @transform_9(%arg0: i32) -> (i32, i32) {
    %c0_i32 = arith.constant 0 : i32
    %c0_i32_0 = arith.constant 0 : i32
    %c0_i32_1 = arith.constant 0 : i32
    return %c0_i32, %c0_i32_0 : i32, i32
  }
  func.func @transform_10(%arg0: i32) -> (i32, i32, i32) {
    %c0_i32 = arith.constant 0 : i32
    %c0_i32_0 = arith.constant 0 : i32
    %c0_i32_1 = arith.constant 0 : i32
    return %arg0, %c0_i32, %c0_i32_0 : i32, i32, i32
  }
}

</mosaic_0001>

<llo_original>
// kernel: tpu_custom_call.1
$region0: #{tpu_custom_call.1}
  #allocation0 [shape = 'u32[]', space=smem, size = 0x4, offset = 0x4, fixed_abs, tag = 'smem constant byte address 0x4 - core index']
  #allocation1 [shape = 'u32[144,128]{1,0:T(1,128)}', space=vmem, size = 0x12000, scoped, tag = 'internal scratch']
  %s0 = inlined_call_operand.vmem [shape: s32[2,8,1], index: 0, kind: input, shape index: {}]
  %s1 = inlined_call_operand.vmem [shape: bf16[64,32], index: 1, kind: input, shape index: {}]
  %s2 = inlined_call_operand.vmem [shape: f32[8,32], index: 2, kind: input, shape index: {}]
  %s3 = inlined_call_operand.vmem [shape: bf16[2,32,96], index: 3, kind: input, shape index: {}]
  %s4 = inlined_call_operand.vmem [shape: bf16[2,32,32], index: 4, kind: input, shape index: {}]
  %s5 = inlined_call_operand.vmem [shape: bf16[2,32,64], index: 5, kind: input, shape index: {}]
  %s6 = inlined_call_operand.vmem [shape: bf16[2,64,32], index: 6, kind: input, shape index: {}]
  %s7 = inlined_call_operand.vmem [shape: f32[2,6,64], index: 7, kind: input, shape index: {}]
  %s8 = inlined_call_operand.vmem [shape: bf16[32,128], index: 8, kind: input, shape index: {}]
  %s9 = inlined_call_operand.vmem [shape: f32[3,128], index: 9, kind: input, shape index: {}]
  %s10 = inlined_call_operand.hbm [shape: f32[2,8,128], index: 10, kind: output, shape index: {}]
  %s11 = sld [smem:[#allocation0]]
  $region73: #{tpu_custom_call.1} parent=0
    _
  %s13 = ssub.s32 1, %s11
  %s14 = scalar_select 0, %s13, %s11
  $region1: #{tpu_custom_call.1} parent=0
    #allocation2 [shape = 'u8[8192]{0}', space=vmem, size = 0x2000, scoped, tag = 'output window, operand 0']
    #allocation3 [shape = 's32[2]{0}', space=sflag, size = 0x8, scoped, tag = 'scoped memory for tpu_custom_call.1']
    %15 = vsyncpa [#allocation3], 0
    %s16 = scalar_lea.sflag [#allocation3], 1
    %17 = vsyncpa %s16, 0
    loop: start=0, step=1, limit=4
    $region2: #{tpu_custom_call.1} parent=1 // loop_pre_header
      _
    $region3: #{tpu_custom_call.1} parent=1 // loop_header
      %s19 = sphi 0, %s23
      %p20 = scmp.ge.s32.totalorder %s19, 4
      %s29 = sphi 0, %s31
      %s32 = sphi 0, %s29
      %s33 = sphi 0, %s32
      %s49 = sphi 0, %s33
      %s53 = sphi 0, %s53
      %s55 = sphi 0, %s53
      %s56 = sphi 0, %s55
      %s70 = sphi 0, %s56
      %s74 = sphi 0, %s74
      %s76 = sphi 0, %s74
      %s77 = sphi 0, %s76
      %s91 = sphi 0, %s77
      %s95 = sphi 0, %s95
      %s97 = sphi 0, %s95
      %s98 = sphi 0, %s97
      %s112 = sphi 0, %s98
      %s116 = sphi 0, %s116
      %s118 = sphi 0, %s116
      %s119 = sphi 0, %s118
      %s133 = sphi 0, %s119
      %s137 = sphi 0, %s137
      %s139 = sphi 0, %s137
      %s140 = sphi 0, %s139
      %s154 = sphi 0, %s140
      %s158 = sphi 0, %s158
      %s160 = sphi 0, %s158
      %s161 = sphi 0, %s160
      %s175 = sphi 0, %s161
      %s179 = sphi 0, %s179
      %s181 = sphi 0, %s179
      %s182 = sphi 0, %s181
      %s196 = sphi 0, %s182
      %s200 = sphi 0, %s200
      %s202 = sphi 0, %s200
      %s203 = sphi 0, %s202
      %s217 = sphi 0, %s203
      %s221 = sphi 0, %s221
      %s223 = sphi 0, %s221
      %s224 = sphi 0, %s223
      %s238 = sphi 0, %s224
      %s244 = sphi 0, %s246
      %s247 = sphi 0, %s244
      %s248 = sphi 0, %s247
      %s264 = sphi 0, %s248
    $region4: #{tpu_custom_call.1} parent=1 // loop_header_branch
      %22 = sbr.rel (%p20) target = $region8
    $region5: #{tpu_custom_call.1} parent=1 // loop_body
      %s24 = ssub.s32 %s19, 1
      %s25 = ssub.s32 %s19, 2
      %s26 = sadd.s32 %s19, 1
      %s27 = ssub.s32 %s19, %s26
      %p28 = scmp.eq.s32.totalorder %s27, 0
      %s30 = sadd.s32 %s29, 1
      %s31 = scalar_select %p28, %s29, %s30
      %p34 = pneg %p28
      %p35 = scmp.eq.s32.totalorder %s19, 1
      %p36 = por %p34, %p35
      %p37 = scmp.ne.s32.totalorder %s29, %s32
      %p38 = scmp.eq.s32.totalorder %s19, 0
      %p39 = por %p37, %p38
      %p40 = scmp.ne.s32.totalorder %s29, %s32
      %p41 = scmp.eq.s32.totalorder %s24, 1
      %p42 = por %p40, %p41
      %p43 = scmp.ne.s32.totalorder %s32, %s33
      %p44 = scmp.eq.s32.totalorder %s24, 0
      %p45 = por %p43, %p44
      %p46 = scmp.ne.s32.totalorder %s32, %s33
      %p47 = scmp.eq.s32.totalorder %s25, 1
      %p48 = por %p46, %p47
      %p50 = scmp.ne.s32.totalorder %s33, %s49
      %p51 = scmp.eq.s32.totalorder %s25, 0
      %p52 = por %p50, %p51
      %s54 = sadd.s32 %s53, 1
      %p57 = scmp.eq.s32.totalorder %s19, 1
      %p58 = scmp.ne.s32.totalorder %s53, %s55
      %p59 = scmp.eq.s32.totalorder %s19, 0
      %p60 = por %p58, %p59
      %p61 = scmp.ne.s32.totalorder %s53, %s55
      %p62 = scmp.eq.s32.totalorder %s24, 1
      %p63 = por %p61, %p62
      %p64 = scmp.ne.s32.totalorder %s55, %s56
      %p65 = scmp.eq.s32.totalorder %s24, 0
      %p66 = por %p64, %p65
      %p67 = scmp.ne.s32.totalorder %s55, %s56
      %p68 = scmp.eq.s32.totalorder %s25, 1
      %p69 = por %p67, %p68
      %p71 = scmp.ne.s32.totalorder %s56, %s70
      %p72 = scmp.eq.s32.totalorder %s25, 0
      %p73 = por %p71, %p72
      %s75 = sadd.s32 %s74, 1
      %p78 = scmp.eq.s32.totalorder %s19, 1
      %p79 = scmp.ne.s32.totalorder %s74, %s76
      %p80 = scmp.eq.s32.totalorder %s19, 0
      %p81 = por %p79, %p80
      %p82 = scmp.ne.s32.totalorder %s74, %s76
      %p83 = scmp.eq.s32.totalorder %s24, 1
      %p84 = por %p82, %p83
      %p85 = scmp.ne.s32.totalorder %s76, %s77
      %p86 = scmp.eq.s32.totalorder %s24, 0
      %p87 = por %p85, %p86
      %p88 = scmp.ne.s32.totalorder %s76, %s77
      %p89 = scmp.eq.s32.totalorder %s25, 1
      %p90 = por %p88, %p89
      %p92 = scmp.ne.s32.totalorder %s77, %s91
      %p93 = scmp.eq.s32.totalorder %s25, 0
      %p94 = por %p92, %p93
      %s96 = sadd.s32 %s95, 1
      %p99 = scmp.eq.s32.totalorder %s19, 1
      %p100 = scmp.ne.s32.totalorder %s95, %s97
      %p101 = scmp.eq.s32.totalorder %s19, 0
      %p102 = por %p100, %p101
      %p103 = scmp.ne.s32.totalorder %s95, %s97
      %p104 = scmp.eq.s32.totalorder %s24, 1
      %p105 = por %p103, %p104
      %p106 = scmp.ne.s32.totalorder %s97, %s98
      %p107 = scmp.eq.s32.totalorder %s24, 0
      %p108 = por %p106, %p107
      %p109 = scmp.ne.s32.totalorder %s97, %s98
      %p110 = scmp.eq.s32.totalorder %s25, 1
      %p111 = por %p109, %p110
      %p113 = scmp.ne.s32.totalorder %s98, %s112
      %p114 = scmp.eq.s32.totalorder %s25, 0
      %p115 = por %p113, %p114
      %s117 = sadd.s32 %s116, 1
      %p120 = scmp.eq.s32.totalorder %s19, 1
      %p121 = scmp.ne.s32.totalorder %s116, %s118
      %p122 = scmp.eq.s32.totalorder %s19, 0
      %p123 = por %p121, %p122
      %p124 = scmp.ne.s32.totalorder %s116, %s118
      %p125 = scmp.eq.s32.totalorder %s24, 1
      %p126 = por %p124, %p125
      %p127 = scmp.ne.s32.totalorder %s118, %s119
      %p128 = scmp.eq.s32.totalorder %s24, 0
      %p129 = por %p127, %p128
      %p130 = scmp.ne.s32.totalorder %s118, %s119
      %p131 = scmp.eq.s32.totalorder %s25, 1
      %p132 = por %p130, %p131
      %p134 = scmp.ne.s32.totalorder %s119, %s133
      %p135 = scmp.eq.s32.totalorder %s25, 0
      %p136 = por %p134, %p135
      %s138 = sadd.s32 %s137, 1
      %p141 = scmp.eq.s32.totalorder %s19, 1
      %p142 = scmp.ne.s32.totalorder %s137, %s139
      %p143 = scmp.eq.s32.totalorder %s19, 0
      %p144 = por %p142, %p143
      %p145 = scmp.ne.s32.totalorder %s137, %s139
      %p146 = scmp.eq.s32.totalorder %s24, 1
      %p147 = por %p145, %p146
      %p148 = scmp.ne.s32.totalorder %s139, %s140
      %p149 = scmp.eq.s32.totalorder %s24, 0
      %p150 = por %p148, %p149
      %p151 = scmp.ne.s32.totalorder %s139, %s140
      %p152 = scmp.eq.s32.totalorder %s25, 1
      %p153 = por %p151, %p152
      %p155 = scmp.ne.s32.totalorder %s140, %s154
      %p156 = scmp.eq.s32.totalorder %s25, 0
      %p157 = por %p155, %p156
      %s159 = sadd.s32 %s158, 1
      %p162 = scmp.eq.s32.totalorder %s19, 1
      %p163 = scmp.ne.s32.totalorder %s158, %s160
      %p164 = scmp.eq.s32.totalorder %s19, 0
      %p165 = por %p163, %p164
      %p166 = scmp.ne.s32.totalorder %s158, %s160
      %p167 = scmp.eq.s32.totalorder %s24, 1
      %p168 = por %p166, %p167
      %p169 = scmp.ne.s32.totalorder %s160, %s161
      %p170 = scmp.eq.s32.totalorder %s24, 0
      %p171 = por %p169, %p170
      %p172 = scmp.ne.s32.totalorder %s160, %s161
      %p173 = scmp.eq.s32.totalorder %s25, 1
      %p174 = por %p172, %p173
      %p176 = scmp.ne.s32.totalorder %s161, %s175
      %p177 = scmp.eq.s32.totalorder %s25, 0
      %p178 = por %p176, %p177
      %s180 = sadd.s32 %s179, 1
      %p183 = scmp.eq.s32.totalorder %s19, 1
      %p184 = scmp.ne.s32.totalorder %s179, %s181
      %p185 = scmp.eq.s32.totalorder %s19, 0
      %p186 = por %p184, %p185
      %p187 = scmp.ne.s32.totalorder %s179, %s181
      %p188 = scmp.eq.s32.totalorder %s24, 1
      %p189 = por %p187, %p188
      %p190 = scmp.ne.s32.totalorder %s181, %s182
      %p191 = scmp.eq.s32.totalorder %s24, 0
      %p192 = por %p190, %p191
      %p193 = scmp.ne.s32.totalorder %s181, %s182
      %p194 = scmp.eq.s32.totalorder %s25, 1
      %p195 = por %p193, %p194
      %p197 = scmp.ne.s32.totalorder %s182, %s196
      %p198 = scmp.eq.s32.totalorder %s25, 0
      %p199 = por %p197, %p198
      %s201 = sadd.s32 %s200, 1
      %p204 = scmp.eq.s32.totalorder %s19, 1
      %p205 = scmp.ne.s32.totalorder %s200, %s202
      %p206 = scmp.eq.s32.totalorder %s19, 0
      %p207 = por %p205, %p206
      %p208 = scmp.ne.s32.totalorder %s200, %s202
      %p209 = scmp.eq.s32.totalorder %s24, 1
      %p210 = por %p208, %p209
      %p211 = scmp.ne.s32.totalorder %s202, %s203
      %p212 = scmp.eq.s32.totalorder %s24, 0
      %p213 = por %p211, %p212
      %p214 = scmp.ne.s32.totalorder %s202, %s203
      %p215 = scmp.eq.s32.totalorder %s25, 1
      %p216 = por %p214, %p215
      %p218 = scmp.ne.s32.totalorder %s203, %s217
      %p219 = scmp.eq.s32.totalorder %s25, 0
      %p220 = por %p218, %p219
      %s222 = sadd.s32 %s221, 1
      %p225 = scmp.eq.s32.totalorder %s19, 1
      %p226 = scmp.ne.s32.totalorder %s221, %s223
      %p227 = scmp.eq.s32.totalorder %s19, 0
      %p228 = por %p226, %p227
      %p229 = scmp.ne.s32.totalorder %s221, %s223
      %p230 = scmp.eq.s32.totalorder %s24, 1
      %p231 = por %p229, %p230
      %p232 = scmp.ne.s32.totalorder %s223, %s224
      %p233 = scmp.eq.s32.totalorder %s24, 0
      %p234 = por %p232, %p233
      %p235 = scmp.ne.s32.totalorder %s223, %s224
      %p236 = scmp.eq.s32.totalorder %s25, 1
      %p237 = por %p235, %p236
      %p239 = scmp.ne.s32.totalorder %s224, %s238
      %p240 = scmp.eq.s32.totalorder %s25, 0
      %p241 = por %p239, %p240
      %s242 = ssub.s32 %s19, %s26
      %p243 = scmp.eq.s32.totalorder %s242, 0
      %s245 = sadd.s32 %s244, 1
      %s246 = scalar_select %p243, %s244, %s245
      %p249 = pneg %p243
      %p250 = scmp.eq.s32.totalorder %s19, 1
      %p251 = por %p249, %p250
      %p252 = scmp.ne.s32.totalorder %s244, %s247
      %p253 = scmp.eq.s32.totalorder %s19, 0
      %p254 = por %p252, %p253
      %p255 = scmp.ne.s32.totalorder %s244, %s247
      %p256 = scmp.eq.s32.totalorder %s24, 1
      %p257 = por %p255, %p256
      %p258 = scmp.ne.s32.totalorder %s247, %s248
      %p259 = scmp.eq.s32.totalorder %s24, 0
      %p260 = por %p258, %p259
      %p261 = scmp.ne.s32.totalorder %s247, %s248
      %p262 = scmp.eq.s32.totalorder %s25, 1
      %p263 = por %p261, %p262
      %p265 = scmp.ne.s32.totalorder %s248, %s264
      %p266 = scmp.eq.s32.totalorder %s25, 0
      %p267 = por %p265, %p266
      %p268 = scmp.le.s32.totalorder 1, %s19
      %p269 = scmp.lt.s32.totalorder %s19, 3
      %p270 = pnand %p268, %p269
      %p271 = pneg %p270
      // Predicated region
      $region9: #{tpu_custom_call.1} parent=5 // pred_check
        _
      $region10: #{tpu_custom_call.1} parent=5 // pred_check_branch
        %273 = sbr.rel (%p270) target = $region12
      $region11: #{tpu_custom_call.1} parent=5 // pred_region
        %s274 = ssub.s32 %s19, 1
        // Predicated region
        $region13: #{tpu_custom_call.1} parent=11 // pred_check
          %p275 = pneg %p66
        $region14: #{tpu_custom_call.1} parent=11 // pred_check_branch
          %277 = sbr.rel (%p275) target = $region16
        $region15: #{tpu_custom_call.1} parent=11 // pred_region
          _
        $region16: #{tpu_custom_call.1} parent=11 // pred_fallthru
          _
        // Predicated region
        $region17: #{tpu_custom_call.1} parent=11 // pred_check
          %p278 = pneg %p87
        $region18: #{tpu_custom_call.1} parent=11 // pred_check_branch
          %280 = sbr.rel (%p278) target = $region20
        $region19: #{tpu_custom_call.1} parent=11 // pred_region
          _
        $region20: #{tpu_custom_call.1} parent=11 // pred_fallthru
          _
        // Predicated region
        $region21: #{tpu_custom_call.1} parent=11 // pred_check
          %p281 = pneg %p108
        $region22: #{tpu_custom_call.1} parent=11 // pred_check_branch
          %283 = sbr.rel (%p281) target = $region24
        $region23: #{tpu_custom_call.1} parent=11 // pred_region
          _
        $region24: #{tpu_custom_call.1} parent=11 // pred_fallthru
          _
        // Predicated region
        $region25: #{tpu_custom_call.1} parent=11 // pred_check
          %p284 = pneg %p129
        $region26: #{tpu_custom_call.1} parent=11 // pred_check_branch
          %286 = sbr.rel (%p284) target = $region28
        $region27: #{tpu_custom_call.1} parent=11 // pred_region
          _
        $region28: #{tpu_custom_call.1} parent=11 // pred_fallthru
          _
        // Predicated region
        $region29: #{tpu_custom_call.1} parent=11 // pred_check
          %p287 = pneg %p150
        $region30: #{tpu_custom_call.1} parent=11 // pred_check_branch
          %289 = sbr.rel (%p287) target = $region32
        $region31: #{tpu_custom_call.1} parent=11 // pred_region
          _
        $region32: #{tpu_custom_call.1} parent=11 // pred_fallthru
          _
        // Predicated region
        $region33: #{tpu_custom_call.1} parent=11 // pred_check
          %p290 = pneg %p171
        $region34: #{tpu_custom_call.1} parent=11 // pred_check_branch
          %292 = sbr.rel (%p290) target = $region36
        $region35: #{tpu_custom_call.1} parent=11 // pred_region
          _
        $region36: #{tpu_custom_call.1} parent=11 // pred_fallthru
          _
        // Predicated region
        $region37: #{tpu_custom_call.1} parent=11 // pred_check
          %p293 = pneg %p192
        $region38: #{tpu_custom_call.1} parent=11 // pred_check_branch
          %295 = sbr.rel (%p293) target = $region40
        $region39: #{tpu_custom_call.1} parent=11 // pred_region
          _
        $region40: #{tpu_custom_call.1} parent=11 // pred_fallthru
          _
        // Predicated region
        $region41: #{tpu_custom_call.1} parent=11 // pred_check
          %p296 = pneg %p213
        $region42: #{tpu_custom_call.1} parent=11 // pred_check_branch
          %298 = sbr.rel (%p296) target = $region44
        $region43: #{tpu_custom_call.1} parent=11 // pred_region
          _
        $region44: #{tpu_custom_call.1} parent=11 // pred_fallthru
          _
        // Predicated region
        $region45: #{tpu_custom_call.1} parent=11 // pred_check
          %p299 = pneg %p234
        $region46: #{tpu_custom_call.1} parent=11 // pred_check_branch
          %301 = sbr.rel (%p299) target = $region48
        $region47: #{tpu_custom_call.1} parent=11 // pred_region
          _
        $region48: #{tpu_custom_call.1} parent=11 // pred_fallthru
          _
      $region12: #{tpu_custom_call.1} parent=5 // pred_fallthru
        _
      %p302 = scmp.lt.s32.totalorder %s19, 2
      // Predicated region
      $region49: #{tpu_custom_call.1} parent=5 // pred_check
        %p303 = pneg %p302
      $region50: #{tpu_custom_call.1} parent=5 // pred_check_branch
        %305 = sbr.rel (%p303) target = $region52
      $region51: #{tpu_custom_call.1} parent=5 // pred_region
        // Predicated region
        $region53: #{tpu_custom_call.1} parent=51 // pred_check
          %p306 = pneg %p39
        $region54: #{tpu_custom_call.1} parent=51 // pred_check_branch
          %308 = sbr.rel (%p306) target = $region56
        $region55: #{tpu_custom_call.1} parent=51 // pred_region
          %p309 = scmp.lt.s32.totalorder %s19, 1
          %s310 = scalar_select %p309, %s19, 1
          %s311 = smul.addr %s310, 8
          %s312 = scalar_lea.vmem %s0, %s311
        $region56: #{tpu_custom_call.1} parent=51 // pred_fallthru
          _
      $region52: #{tpu_custom_call.1} parent=5 // pred_fallthru
        _
      %p313 = scmp.le.s32.totalorder 1, %s19
      %p314 = scmp.lt.s32.totalorder %s19, 3
      %p315 = pnand %p313, %p314
      %p316 = pneg %p315
      // Predicated region
      $region57: #{tpu_custom_call.1} parent=5 // pred_check
        _
      $region58: #{tpu_custom_call.1} parent=5 // pred_check_branch
        %318 = sbr.rel (%p315) target = $region60
      $region59: #{tpu_custom_call.1} parent=5 // pred_region
        %s319 = ssub.s32 %s19, 1
        %p320 = scmp.lt.s32.totalorder %s24, 1
        %s321 = scalar_select %p320, %s24, 1
        %s322 = smul.addr %s321, 8
        %s323 = scalar_lea.vmem %s0, %s322
        %p324 = pneg %p45
        %p325 = pneg %p42
        %p326 = pneg %p66
        %p327 = pneg %p63
        %p328 = pneg %p87
        %p329 = pneg %p84
        %p330 = pneg %p108
        %p331 = pneg %p105
        %p332 = pneg %p129
        %p333 = pneg %p126
        %p334 = pneg %p150
        %p335 = pneg %p147
        %p336 = pneg %p171
        %p337 = pneg %p168
        %p338 = pneg %p192
        %p339 = pneg %p189
        %p340 = pneg %p213
        %p341 = pneg %p210
        %p342 = pneg %p234
        %p343 = pneg %p231
        %p344 = pneg %p260
        %p345 = pneg %p257
        %s346 = sand.u32 %s247, 1
        %s347 = scalar_lea.sflag [#allocation3], %s346
        %s348 = sand.u32 %s247, 1
        %s349 = smul.addr %s348, 8
        %s350 = scalar_lea.vmem [#allocation2], %s349
        %p351 = scmp.lt.s32.totalorder %s24, 1
        %s352 = scalar_select %p351, %s24, 1
        %s353 = smul.addr %s352, 8
        %s354 = scalar_lea.vmem %s0, %s353
        %v356 = vld [vmem:[%s354] sm:$0xff]
        %v357 = vlaneseq
        %v358 = vand.u32 %v357, 127
        %359 = vset.pattern.permute.xlu0 0
        %360 = vperm.xlu0 %359, %v356
        %v361 = vpop.permute.xlu0 %360
        %vm362 = vcmp.eq.s32.totalorder %v361, %v358
        %v363 = vsel %vm362, 1, 0
        %v364 = vcvt.s32.f32 %v363
        %v365 = vpack.c.bf16 %v364, %v364
        %v366 = vld [vmem:[%s1] sm:$0xf]
        %v367 = vld [vmem:[%s1 + $0x4] sm:$0xf]
        %v368 = vld [vmem:[%s1 + $0x8] sm:$0xf]
        %v369 = vld [vmem:[%s1 + $0xc] sm:$0xf]
        %v370 = vld [vmem:[%s1 + $0x10] sm:$0xf]
        %v371 = vld [vmem:[%s1 + $0x14] sm:$0xf]
        %v372 = vld [vmem:[%s1 + $0x18] sm:$0xf]
        %v373 = vld [vmem:[%s1 + $0x1c] sm:$0xf]
        %v374 = vld [vmem:[%s2] sm:$0xff]
        %v383 = vunpack.c.l.b16 %v366
        %v384 = vunpack.c.l.b16 %v367
        %v385 = vunpack.c.l.b16 %v368
        %v386 = vunpack.c.l.b16 %v369
        %v387 = vunpack.c.l.b16 %v370
        %v388 = vunpack.c.l.b16 %v371
        %v389 = vunpack.c.l.b16 %v372
        %v390 = vunpack.c.l.b16 %v373
        %v391 = vpack.c.b16 %v384, %v383
        %v392 = vpack.c.b16 %v386, %v385
        %v393 = vpack.c.b16 %v388, %v387
        %v394 = vpack.c.b16 %v390, %v389
        %vm399 = vcmask 523264
        %v401 = vsel %vm399, %v365, 0
        %403 = vmatprep.subr.bf16.mxu0 0
        %404 = vmatpush1.bf16.msra.mxu0 %v391
        %405 = vmatprep.subr.bf16.mxu0 0
        %406 = vmatpush1.bf16.msra.mxu0 %v392
        %407 = vmatprep.subr.bf16.mxu0 0
        %408 = vmatpush1.bf16.msra.mxu0 %v393
        %409 = vmatprep.subr.bf16.mxu0 0
        %410 = vmatpush1.bf16.msra.mxu0 %v394
        %411 = vmatprep.subr.bf16.mxu0 0
        %412 = vmatpush1.bf16.msra.mxu0 0
        %413 = vmatprep.subr.bf16.mxu0 0
        %414 = vmatpush1.bf16.msra.mxu0 0
        %415 = vmatprep.subr.bf16.mxu0 0
        %416 = vmatpush1.bf16.msra.mxu0 0
        %417 = vmatprep.subr.bf16.mxu0 0
        %418 = vmatpush1.bf16.msra.mxu0 0
        %419 = vmatprep.subr.bf16.mxu0 0
        %420 = vmatpush1.bf16.msra.mxu0 0
        %421 = vmatprep.subr.bf16.mxu0 0
        %422 = vmatpush1.bf16.msra.mxu0 0
        %423 = vmatprep.subr.bf16.mxu0 0
        %424 = vmatpush1.bf16.msra.mxu0 0
        %425 = vmatprep.subr.bf16.mxu0 0
        %426 = vmatpush1.bf16.msra.mxu0 0
        %427 = vmatprep.subr.bf16.mxu0 0
        %428 = vmatpush1.bf16.msra.mxu0 0
        %429 = vmatprep.subr.bf16.mxu0 0
        %430 = vmatpush1.bf16.msra.mxu0 0
        %431 = vmatprep.subr.bf16.mxu0 0
        %432 = vmatpush1.bf16.msra.mxu0 0
        %433 = vmatprep.subr.bf16.mxu0 0
        %434 = vmatpush1.bf16.msra.mxu0 0
        %435 = vmatprep.mubr.bf16.mxu0 0
        %436 = vmatmul.mubr.bf16.gmra.mrb[0].mxu0 %v401
        %v437 = vpop.f32.mrb[0].mxu0
        %v438 = vadd.f32 %v374, %v437
        %v439 = vpop.f32.mrb[0].mxu0
        %v440 = vpop.f32.mrb[0].mxu0
        %v441 = vpop.f32.mrb[0].mxu0
        %442 = vdwg.mxu0
        %v443 = vlaneseq
        %v444 = vshrl.u32 %v443, 7
        %vm445 = vcmp.ge.s32.totalorder %v444, %v358
        %v446 = vsel %vm445, 0.0, -1e+30
        %v447 = vld [vmem:[%s7] sm:$0x3f]
        %vm448 = vcmask 261120
        %v449 = vsel %vm448, %v438, 0.0
        %450 = vadd.xlane.f32.xlu0 %v449
        %v451 = vpop.xlane.xlu0 %450
        %v452 = vrcp.pop 32.0
        %v453 = vmul.f32 %v451, %v452
        %v454 = vsub.f32 %v438, %v453
        %v455 = vmul.f32 %v454, %v454
        %v456 = vsel %vm448, %v455, 0.0
        %457 = vadd.xlane.f32.xlu0 %v456
        %v458 = vpop.xlane.xlu0 %457
        %v459 = vmul.f32 %v458, %v452
        %v460 = vadd.f32 %v459, 1e-05
        %v461 = vrsqrt.pop %v460
        %v462 = vmul.f32 %v454, %v461
        %v463 = vlaneseq
        %v464 = vshrl.u32 %v463, 7
        %v465 = vsub.s32 0, %v464
        %v466 = vrot.slane %v447, %v465
        %v467 = vmul.f32 %v462, %v466
        %v468 = vlaneseq
        %v469 = vshrl.u32 %v468, 7
        %v470 = vsub.s32 1, %v469
        %v471 = vrot.slane %v447, %v470
        %v472 = vadd.f32 %v467, %v471
        %v473 = vpack.c.bf16 %v472, %v472
        %v474 = vld [vmem:[%s3] sm:$0xf]
        %v475 = vld [vmem:[%s3 + $0x4] sm:$0xf]
        %v476 = vld [vmem:[%s3 + $0x8] sm:$0xf]
        %v477 = vld [vmem:[%s3 + $0xc] sm:$0xf]
        %v482 = vunpack.c.l.b16 %v474
        %v483 = vunpack.c.l.b16 %v475
        %v484 = vunpack.c.l.b16 %v476
        %v485 = vunpack.c.l.b16 %v477
        %v486 = vpack.c.b16 %v483, %v482
        %v487 = vpack.c.b16 %v485, %v484
        %v491 = vsel %vm448, %v473, 0
        %493 = vmatprep.subr.bf16.mxu0 0
        %494 = vmatpush1.bf16.msra.mxu0 %v486
        %495 = vmatprep.subr.bf16.mxu0 0
        %496 = vmatpush1.bf16.msra.mxu0 %v487
        %497 = vmatprep.subr.bf16.mxu0 0
        %498 = vmatpush1.bf16.msra.mxu0 0
        %499 = vmatprep.subr.bf16.mxu0 0
        %500 = vmatpush1.bf16.msra.mxu0 0
        %501 = vmatprep.subr.bf16.mxu0 0
        %502 = vmatpush1.bf16.msra.mxu0 0
        %503 = vmatprep.subr.bf16.mxu0 0
        %504 = vmatpush1.bf16.msra.mxu0 0
        %505 = vmatprep.subr.bf16.mxu0 0
        %506 = vmatpush1.bf16.msra.mxu0 0
        %507 = vmatprep.subr.bf16.mxu0 0
        %508 = vmatpush1.bf16.msra.mxu0 0
        %509 = vmatprep.subr.bf16.mxu0 0
        %510 = vmatpush1.bf16.msra.mxu0 0
        %511 = vmatprep.subr.bf16.mxu0 0
        %512 = vmatpush1.bf16.msra.mxu0 0
        %513 = vmatprep.subr.bf16.mxu0 0
        %514 = vmatpush1.bf16.msra.mxu0 0
        %515 = vmatprep.subr.bf16.mxu0 0
        %516 = vmatpush1.bf16.msra.mxu0 0
        %517 = vmatprep.subr.bf16.mxu0 0
        %518 = vmatpush1.bf16.msra.mxu0 0
        %519 = vmatprep.subr.bf16.mxu0 0
        %520 = vmatpush1.bf16.msra.mxu0 0
        %521 = vmatprep.subr.bf16.mxu0 0
        %522 = vmatpush1.bf16.msra.mxu0 0
        %523 = vmatprep.subr.bf16.mxu0 0
        %524 = vmatpush1.bf16.msra.mxu0 0
        %525 = vmatprep.mubr.bf16.mxu0 0
        %526 = vmatmul.mubr.bf16.gmra.mrb[0].mxu0 %v491
        %v527 = vpop.f32.mrb[0].mxu0
        %v528 = vadd.f32 0.0, %v527
        %v529 = vpop.f32.mrb[0].mxu0
        %v530 = vpop.f32.mrb[0].mxu0
        %v531 = vpop.f32.mrb[0].mxu0
        %532 = vdwg.mxu0
        %534 = vrot.lane.b32.xlu0 %v528, 120
        %v535 = vpop.permute.xlu0 %534
        %537 = vrot.lane.b32.xlu0 %v528, 112
        %v538 = vpop.permute.xlu0 %537
        %540 = vrot.lane.b32.xlu0 %v528, 104
        %v541 = vpop.permute.xlu0 %540
        %v543 = vpack.c.bf16 %v528, %v528
        %v544 = vpack.c.bf16 %v535, %v535
        %v545 = vpack.c.bf16 %v538, %v538
        %v546 = vpack.c.bf16 %v541, %v541
        %548 = vrot.lane.b32.xlu0 %v543, 96
        %v549 = vpop.permute.xlu0 %548
        %vm550 = vcmask 64512
        %v552 = vsel %vm550, %v543, 0
        %v555 = vsel %vm550, %v549, 0
        %557 = vmatprep.subr.bf16.mxu0 0
        %558 = vmatpush1.bf16.xpose.msra.mxu0 %v555
        %559 = vmatprep.subr.bf16.mxu0 0
        %560 = vmatpush1.bf16.xpose.msra.mxu0 0
        %561 = vmatprep.subr.bf16.mxu0 0
        %562 = vmatpush1.bf16.xpose.msra.mxu0 0
        %563 = vmatprep.subr.bf16.mxu0 0
        %564 = vmatpush1.bf16.xpose.msra.mxu0 0
        %565 = vmatprep.subr.bf16.mxu0 0
        %566 = vmatpush1.bf16.xpose.msra.mxu0 0
        %567 = vmatprep.subr.bf16.mxu0 0
        %568 = vmatpush1.bf16.xpose.msra.mxu0 0
        %569 = vmatprep.subr.bf16.mxu0 0
        %570 = vmatpush1.bf16.xpose.msra.mxu0 0
        %571 = vmatprep.subr.bf16.mxu0 0
        %572 = vmatpush1.bf16.xpose.msra.mxu0 0
        %573 = vmatprep.subr.bf16.mxu0 0
        %574 = vmatpush1.bf16.xpose.msra.mxu0 0
        %575 = vmatprep.subr.bf16.mxu0 0
        %576 = vmatpush1.bf16.xpose.msra.mxu0 0
        %577 = vmatprep.subr.bf16.mxu0 0
        %578 = vmatpush1.bf16.xpose.msra.mxu0 0
        %579 = vmatprep.subr.bf16.mxu0 0
        %580 = vmatpush1.bf16.xpose.msra.mxu0 0
        %581 = vmatprep.subr.bf16.mxu0 0
        %582 = vmatpush1.bf16.xpose.msra.mxu0 0
        %583 = vmatprep.subr.bf16.mxu0 0
        %584 = vmatpush1.bf16.xpose.msra.mxu0 0
        %585 = vmatprep.subr.bf16.mxu0 0
        %586 = vmatpush1.bf16.xpose.msra.mxu0 0
        %587 = vmatprep.subr.bf16.mxu0 0
        %588 = vmatpush1.bf16.xpose.msra.mxu0 0
        %589 = vmatprep.mubr.bf16.mxu0 0
        %590 = vmatmul.mubr.bf16.gmra.mrb[0].mxu0 %v552
        %v591 = vpop.f32.mrb[0].mxu0
        %v592 = vadd.f32 0.0, %v591
        %v593 = vpop.f32.mrb[0].mxu0
        %v594 = vpop.f32.mrb[0].mxu0
        %v595 = vpop.f32.mrb[0].mxu0
        %596 = vdwg.mxu0
        %598 = vrot.lane.b32.xlu0 %v544, 96
        %v599 = vpop.permute.xlu0 %598
        %v601 = vsel %vm550, %v544, 0
        %v604 = vsel %vm550, %v599, 0
        %606 = vmatprep.subr.bf16.mxu0 0
        %607 = vmatpush1.bf16.xpose.msra.mxu0 %v604
        %608 = vmatprep.subr.bf16.mxu0 0
        %609 = vmatpush1.bf16.xpose.msra.mxu0 0
        %610 = vmatprep.subr.bf16.mxu0 0
        %611 = vmatpush1.bf16.xpose.msra.mxu0 0
        %612 = vmatprep.subr.bf16.mxu0 0
        %613 = vmatpush1.bf16.xpose.msra.mxu0 0
        %614 = vmatprep.subr.bf16.mxu0 0
        %615 = vmatpush1.bf16.xpose.msra.mxu0 0
        %616 = vmatprep.subr.bf16.mxu0 0
        %617 = vmatpush1.bf16.xpose.msra.mxu0 0
        %618 = vmatprep.subr.bf16.mxu0 0
        %619 = vmatpush1.bf16.xpose.msra.mxu0 0
        %620 = vmatprep.subr.bf16.mxu0 0
        %621 = vmatpush1.bf16.xpose.msra.mxu0 0
        %622 = vmatprep.subr.bf16.mxu0 0
        %623 = vmatpush1.bf16.xpose.msra.mxu0 0
        %624 = vmatprep.subr.bf16.mxu0 0
        %625 = vmatpush1.bf16.xpose.msra.mxu0 0
        %626 = vmatprep.subr.bf16.mxu0 0
        %627 = vmatpush1.bf16.xpose.msra.mxu0 0
        %628 = vmatprep.subr.bf16.mxu0 0
        %629 = vmatpush1.bf16.xpose.msra.mxu0 0
        %630 = vmatprep.subr.bf16.mxu0 0
        %631 = vmatpush1.bf16.xpose.msra.mxu0 0
        %632 = vmatprep.subr.bf16.mxu0 0
        %633 = vmatpush1.bf16.xpose.msra.mxu0 0
        %634 = vmatprep.subr.bf16.mxu0 0
        %635 = vmatpush1.bf16.xpose.msra.mxu0 0
        %636 = vmatprep.subr.bf16.mxu0 0
        %637 = vmatpush1.bf16.xpose.msra.mxu0 0
        %638 = vmatprep.mubr.bf16.mxu0 0
        %639 = vmatmul.mubr.bf16.gmra.mrb[0].mxu0 %v601
        %v640 = vpop.f32.mrb[0].mxu0
        %v641 = vadd.f32 0.0, %v640
        %v642 = vpop.f32.mrb[0].mxu0
        %v643 = vpop.f32.mrb[0].mxu0
        %v644 = vpop.f32.mrb[0].mxu0
        %645 = vdwg.mxu0
        %647 = vrot.lane.b32.xlu0 %v545, 96
        %v648 = vpop.permute.xlu0 %647
        %v650 = vsel %vm550, %v545, 0
        %v653 = vsel %vm550, %v648, 0
        %655 = vmatprep.subr.bf16.mxu0 0
        %656 = vmatpush1.bf16.xpose.msra.mxu0 %v653
        %657 = vmatprep.subr.bf16.mxu0 0
        %658 = vmatpush1.bf16.xpose.msra.mxu0 0
        %659 = vmatprep.subr.bf16.mxu0 0
        %660 = vmatpush1.bf16.xpose.msra.mxu0 0
        %661 = vmatprep.subr.bf16.mxu0 0
        %662 = vmatpush1.bf16.xpose.msra.mxu0 0
        %663 = vmatprep.subr.bf16.mxu0 0
        %664 = vmatpush1.bf16.xpose.msra.mxu0 0
        %665 = vmatprep.subr.bf16.mxu0 0
        %666 = vmatpush1.bf16.xpose.msra.mxu0 0
        %667 = vmatprep.subr.bf16.mxu0 0
        %668 = vmatpush1.bf16.xpose.msra.mxu0 0
        %669 = vmatprep.subr.bf16.mxu0 0
        %670 = vmatpush1.bf16.xpose.msra.mxu0 0
        %671 = vmatprep.subr.bf16.mxu0 0
        %672 = vmatpush1.bf16.xpose.msra.mxu0 0
        %673 = vmatprep.subr.bf16.mxu0 0
        %674 = vmatpush1.bf16.xpose.msra.mxu0 0
        %675 = vmatprep.subr.bf16.mxu0 0
        %676 = vmatpush1.bf16.xpose.msra.mxu0 0
        %677 = vmatprep.subr.bf16.mxu0 0
        %678 = vmatpush1.bf16.xpose.msra.mxu0 0
        %679 = vmatprep.subr.bf16.mxu0 0
        %680 = vmatpush1.bf16.xpose.msra.mxu0 0
        %681 = vmatprep.subr.bf16.mxu0 0
        %682 = vmatpush1.bf16.xpose.msra.mxu0 0
        %683 = vmatprep.subr.bf16.mxu0 0
        %684 = vmatpush1.bf16.xpose.msra.mxu0 0
        %685 = vmatprep.subr.bf16.mxu0 0
        %686 = vmatpush1.bf16.xpose.msra.mxu0 0
        %687 = vmatprep.mubr.bf16.mxu0 0
        %688 = vmatmul.mubr.bf16.gmra.mrb[0].mxu0 %v650
        %v689 = vpop.f32.mrb[0].mxu0
        %v690 = vadd.f32 0.0, %v689
        %v691 = vpop.f32.mrb[0].mxu0
        %v692 = vpop.f32.mrb[0].mxu0
        %v693 = vpop.f32.mrb[0].mxu0
        %694 = vdwg.mxu0
        %696 = vrot.lane.b32.xlu0 %v546, 96
        %v697 = vpop.permute.xlu0 %696
        %v699 = vsel %vm550, %v546, 0
        %v702 = vsel %vm550, %v697, 0
        %704 = vmatprep.subr.bf16.mxu0 0
        %705 = vmatpush1.bf16.xpose.msra.mxu0 %v702
        %706 = vmatprep.subr.bf16.mxu0 0
        %707 = vmatpush1.bf16.xpose.msra.mxu0 0
        %708 = vmatprep.subr.bf16.mxu0 0
        %709 = vmatpush1.bf16.xpose.msra.mxu0 0
        %710 = vmatprep.subr.bf16.mxu0 0
        %711 = vmatpush1.bf16.xpose.msra.mxu0 0
        %712 = vmatprep.subr.bf16.mxu0 0
        %713 = vmatpush1.bf16.xpose.msra.mxu0 0
        %714 = vmatprep.subr.bf16.mxu0 0
        %715 = vmatpush1.bf16.xpose.msra.mxu0 0
        %716 = vmatprep.subr.bf16.mxu0 0
        %717 = vmatpush1.bf16.xpose.msra.mxu0 0
        %718 = vmatprep.subr.bf16.mxu0 0
        %719 = vmatpush1.bf16.xpose.msra.mxu0 0
        %720 = vmatprep.subr.bf16.mxu0 0
        %721 = vmatpush1.bf16.xpose.msra.mxu0 0
        %722 = vmatprep.subr.bf16.mxu0 0
        %723 = vmatpush1.bf16.xpose.msra.mxu0 0
        %724 = vmatprep.subr.bf16.mxu0 0
        %725 = vmatpush1.bf16.xpose.msra.mxu0 0
        %726 = vmatprep.subr.bf16.mxu0 0
        %727 = vmatpush1.bf16.xpose.msra.mxu0 0
        %728 = vmatprep.subr.bf16.mxu0 0
        %729 = vmatpush1.bf16.xpose.msra.mxu0 0
        %730 = vmatprep.subr.bf16.mxu0 0
        %731 = vmatpush1.bf16.xpose.msra.mxu0 0
        %732 = vmatprep.subr.bf16.mxu0 0
        %733 = vmatpush1.bf16.xpose.msra.mxu0 0
        %734 = vmatprep.subr.bf16.mxu0 0
        %735 = vmatpush1.bf16.xpose.msra.mxu0 0
        %736 = vmatprep.mubr.bf16.mxu0 0
        %737 = vmatmul.mubr.bf16.gmra.mrb[0].mxu0 %v699
        %v738 = vpop.f32.mrb[0].mxu0
        %v739 = vadd.f32 0.0, %v738
        %v740 = vpop.f32.mrb[0].mxu0
        %v741 = vpop.f32.mrb[0].mxu0
        %v742 = vpop.f32.mrb[0].mxu0
        %743 = vdwg.mxu0
        %v744 = vmul.f32 %v592, 0.35355338
        %v745 = vmul.f32 %v641, 0.35355338
        %v746 = vmul.f32 %v690, 0.35355338
        %v747 = vmul.f32 %v739, 0.35355338
        %v748 = vadd.f32 %v744, %v446
        %v749 = vadd.f32 %v745, %v446
        %v750 = vadd.f32 %v746, %v446
        %v751 = vadd.f32 %v747, %v446
        %v752 = vsel %vm550, %v748, -inf
        %753 = vmax.xlane.f32.xlu0 %v752
        %v754 = vpop.xlane.xlu0 %753
        %v755 = vsel %vm550, %v749, -inf
        %756 = vmax.xlane.f32.xlu0 %v755
        %v757 = vpop.xlane.xlu0 %756
        %v758 = vsel %vm550, %v750, -inf
        %759 = vmax.xlane.f32.xlu0 %v758
        %v760 = vpop.xlane.xlu0 %759
        %v761 = vsel %vm550, %v751, -inf
        %762 = vmax.xlane.f32.xlu0 %v761
        %v763 = vpop.xlane.xlu0 %762
        %v764 = vsub.f32 %v748, %v754
        %v765 = vsub.f32 %v749, %v757
        %v766 = vsub.f32 %v750, %v760
        %v767 = vsub.f32 %v751, %v763
        %v768 = vmul.f32 %v764, 1.442695
        %v769 = vpow.pop %v768
        %v770 = vmul.f32 %v765, 1.442695
        %v771 = vpow.pop %v770
        %v772 = vmul.f32 %v766, 1.442695
        %v773 = vpow.pop %v772
        %v774 = vmul.f32 %v767, 1.442695
        %v775 = vpow.pop %v774
        %v776 = vsel %vm550, %v769, 0.0
        %777 = vadd.xlane.f32.xlu0 %v776
        %v778 = vpop.xlane.xlu0 %777
        %v779 = vsel %vm550, %v771, 0.0
        %780 = vadd.xlane.f32.xlu0 %v779
        %v781 = vpop.xlane.xlu0 %780
        %v782 = vsel %vm550, %v773, 0.0
        %783 = vadd.xlane.f32.xlu0 %v782
        %v784 = vpop.xlane.xlu0 %783
        %v785 = vsel %vm550, %v775, 0.0
        %786 = vadd.xlane.f32.xlu0 %v785
        %v787 = vpop.xlane.xlu0 %786
        %v788 = vrcp.pop %v778
        %v789 = vrcp.pop %v781
        %v790 = vrcp.pop %v784
        %v791 = vrcp.pop %v787
        %v792 = vmul.f32 %v769, %v788
        %v793 = vmul.f32 %v771, %v789
        %v794 = vmul.f32 %v773, %v790
        %v795 = vmul.f32 %v775, %v791
        %v796 = vpack.c.bf16 %v792, %v792
        %v797 = vpack.c.bf16 %v793, %v793
        %v798 = vpack.c.bf16 %v794, %v794
        %v799 = vpack.c.bf16 %v795, %v795
        %800 = vrot.lane.b32.xlu0 %v543, 64
        %v801 = vpop.permute.xlu0 %800
        %v803 = vsel %vm550, %v796, 0
        %vm805 = vcmask 1043456
        %v807 = vsel %vm805, %v801, 0
        %809 = vmatprep.subr.bf16.mxu0 0
        %810 = vmatpush1.bf16.msra.mxu0 %v807
        %811 = vmatprep.subr.bf16.mxu0 0
        %812 = vmatpush1.bf16.msra.mxu0 0
        %813 = vmatprep.subr.bf16.mxu0 0
        %814 = vmatpush1.bf16.msra.mxu0 0
        %815 = vmatprep.subr.bf16.mxu0 0
        %816 = vmatpush1.bf16.msra.mxu0 0
        %817 = vmatprep.subr.bf16.mxu0 0
        %818 = vmatpush1.bf16.msra.mxu0 0
        %819 = vmatprep.subr.bf16.mxu0 0
        %820 = vmatpush1.bf16.msra.mxu0 0
        %821 = vmatprep.subr.bf16.mxu0 0
        %822 = vmatpush1.bf16.msra.mxu0 0
        %823 = vmatprep.subr.bf16.mxu0 0
        %824 = vmatpush1.bf16.msra.mxu0 0
        %825 = vmatprep.subr.bf16.mxu0 0
        %826 = vmatpush1.bf16.msra.mxu0 0
        %827 = vmatprep.subr.bf16.mxu0 0
        %828 = vmatpush1.bf16.msra.mxu0 0
        %829 = vmatprep.subr.bf16.mxu0 0
        %830 = vmatpush1.bf16.msra.mxu0 0
        %831 = vmatprep.subr.bf16.mxu0 0
        %832 = vmatpush1.bf16.msra.mxu0 0
        %833 = vmatprep.subr.bf16.mxu0 0
        %834 = vmatpush1.bf16.msra.mxu0 0
        %835 = vmatprep.subr.bf16.mxu0 0
        %836 = vmatpush1.bf16.msra.mxu0 0
        %837 = vmatprep.subr.bf16.mxu0 0
        %838 = vmatpush1.bf16.msra.mxu0 0
        %839 = vmatprep.subr.bf16.mxu0 0
        %840 = vmatpush1.bf16.msra.mxu0 0
        %841 = vmatprep.mubr.bf16.mxu0 0
        %842 = vmatmul.mubr.bf16.gmra.mrb[0].mxu0 %v803
        %v843 = vpop.f32.mrb[0].mxu0
        %v844 = vadd.f32 0.0, %v843
        %v845 = vpop.f32.mrb[0].mxu0
        %v846 = vpop.f32.mrb[0].mxu0
        %v847 = vpop.f32.mrb[0].mxu0
        %848 = vdwg.mxu0
        %849 = vrot.lane.b32.xlu0 %v544, 64
        %v850 = vpop.permute.xlu0 %849
        %v852 = vsel %vm550, %v797, 0
        %v855 = vsel %vm805, %v850, 0
        %857 = vmatprep.subr.bf16.mxu0 0
        %858 = vmatpush1.bf16.msra.mxu0 %v855
        %859 = vmatprep.subr.bf16.mxu0 0
        %860 = vmatpush1.bf16.msra.mxu0 0
        %861 = vmatprep.subr.bf16.mxu0 0
        %862 = vmatpush1.bf16.msra.mxu0 0
        %863 = vmatprep.subr.bf16.mxu0 0
        %864 = vmatpush1.bf16.msra.mxu0 0
        %865 = vmatprep.subr.bf16.mxu0 0
        %866 = vmatpush1.bf16.msra.mxu0 0
        %867 = vmatprep.subr.bf16.mxu0 0
        %868 = vmatpush1.bf16.msra.mxu0 0
        %869 = vmatprep.subr.bf16.mxu0 0
        %870 = vmatpush1.bf16.msra.mxu0 0
        %871 = vmatprep.subr.bf16.mxu0 0
        %872 = vmatpush1.bf16.msra.mxu0 0
        %873 = vmatprep.subr.bf16.mxu0 0
        %874 = vmatpush1.bf16.msra.mxu0 0
        %875 = vmatprep.subr.bf16.mxu0 0
        %876 = vmatpush1.bf16.msra.mxu0 0
        %877 = vmatprep.subr.bf16.mxu0 0
        %878 = vmatpush1.bf16.msra.mxu0 0
        %879 = vmatprep.subr.bf16.mxu0 0
        %880 = vmatpush1.bf16.msra.mxu0 0
        %881 = vmatprep.subr.bf16.mxu0 0
        %882 = vmatpush1.bf16.msra.mxu0 0
        %883 = vmatprep.subr.bf16.mxu0 0
        %884 = vmatpush1.bf16.msra.mxu0 0
        %885 = vmatprep.subr.bf16.mxu0 0
        %886 = vmatpush1.bf16.msra.mxu0 0
        %887 = vmatprep.subr.bf16.mxu0 0
        %888 = vmatpush1.bf16.msra.mxu0 0
        %889 = vmatprep.mubr.bf16.mxu0 0
        %890 = vmatmul.mubr.bf16.gmra.mrb[0].mxu0 %v852
        %v891 = vpop.f32.mrb[0].mxu0
        %v892 = vadd.f32 0.0, %v891
        %v893 = vpop.f32.mrb[0].mxu0
        %v894 = vpop.f32.mrb[0].mxu0
        %v895 = vpop.f32.mrb[0].mxu0
        %896 = vdwg.mxu0
        %897 = vrot.lane.b32.xlu0 %v545, 64
        %v898 = vpop.permute.xlu0 %897
        %v900 = vsel %vm550, %v798, 0
        %v903 = vsel %vm805, %v898, 0
        %905 = vmatprep.subr.bf16.mxu0 0
        %906 = vmatpush1.bf16.msra.mxu0 %v903
        %907 = vmatprep.subr.bf16.mxu0 0
        %908 = vmatpush1.bf16.msra.mxu0 0
        %909 = vmatprep.subr.bf16.mxu0 0
        %910 = vmatpush1.bf16.msra.mxu0 0
        %911 = vmatprep.subr.bf16.mxu0 0
        %912 = vmatpush1.bf16.msra.mxu0 0
        %913 = vmatprep.subr.bf16.mxu0 0
        %914 = vmatpush1.bf16.msra.mxu0 0
        %915 = vmatprep.subr.bf16.mxu0 0
        %916 = vmatpush1.bf16.msra.mxu0 0
        %917 = vmatprep.subr.bf16.mxu0 0
        %918 = vmatpush1.bf16.msra.mxu0 0
        %919 = vmatprep.subr.bf16.mxu0 0
        %920 = vmatpush1.bf16.msra.mxu0 0
        %921 = vmatprep.subr.bf16.mxu0 0
        %922 = vmatpush1.bf16.msra.mxu0 0
        %923 = vmatprep.subr.bf16.mxu0 0
        %924 = vmatpush1.bf16.msra.mxu0 0
        %925 = vmatprep.subr.bf16.mxu0 0
        %926 = vmatpush1.bf16.msra.mxu0 0
        %927 = vmatprep.subr.bf16.mxu0 0
        %928 = vmatpush1.bf16.msra.mxu0 0
        %929 = vmatprep.subr.bf16.mxu0 0
        %930 = vmatpush1.bf16.msra.mxu0 0
        %931 = vmatprep.subr.bf16.mxu0 0
        %932 = vmatpush1.bf16.msra.mxu0 0
        %933 = vmatprep.subr.bf16.mxu0 0
        %934 = vmatpush1.bf16.msra.mxu0 0
        %935 = vmatprep.subr.bf16.mxu0 0
        %936 = vmatpush1.bf16.msra.mxu0 0
        %937 = vmatprep.mubr.bf16.mxu0 0
        %938 = vmatmul.mubr.bf16.gmra.mrb[0].mxu0 %v900
        %v939 = vpop.f32.mrb[0].mxu0
        %v940 = vadd.f32 0.0, %v939
        %v941 = vpop.f32.mrb[0].mxu0
        %v942 = vpop.f32.mrb[0].mxu0
        %v943 = vpop.f32.mrb[0].mxu0
        %944 = vdwg.mxu0
        %945 = vrot.lane.b32.xlu0 %v546, 64
        %v946 = vpop.permute.xlu0 %945
        %v948 = vsel %vm550, %v799, 0
        %v951 = vsel %vm805, %v946, 0
        %953 = vmatprep.subr.bf16.mxu0 0
        %954 = vmatpush1.bf16.msra.mxu0 %v951
        %955 = vmatprep.subr.bf16.mxu0 0
        %956 = vmatpush1.bf16.msra.mxu0 0
        %957 = vmatprep.subr.bf16.mxu0 0
        %958 = vmatpush1.bf16.msra.mxu0 0
        %959 = vmatprep.subr.bf16.mxu0 0
        %960 = vmatpush1.bf16.msra.mxu0 0
        %961 = vmatprep.subr.bf16.mxu0 0
        %962 = vmatpush1.bf16.msra.mxu0 0
        %963 = vmatprep.subr.bf16.mxu0 0
        %964 = vmatpush1.bf16.msra.mxu0 0
        %965 = vmatprep.subr.bf16.mxu0 0
        %966 = vmatpush1.bf16.msra.mxu0 0
        %967 = vmatprep.subr.bf16.mxu0 0
        %968 = vmatpush1.bf16.msra.mxu0 0
        %969 = vmatprep.subr.bf16.mxu0 0
        %970 = vmatpush1.bf16.msra.mxu0 0
        %971 = vmatprep.subr.bf16.mxu0 0
        %972 = vmatpush1.bf16.msra.mxu0 0
        %973 = vmatprep.subr.bf16.mxu0 0
        %974 = vmatpush1.bf16.msra.mxu0 0
        %975 = vmatprep.subr.bf16.mxu0 0
        %976 = vmatpush1.bf16.msra.mxu0 0
        %977 = vmatprep.subr.bf16.mxu0 0
        %978 = vmatpush1.bf16.msra.mxu0 0
        %979 = vmatprep.subr.bf16.mxu0 0
        %980 = vmatpush1.bf16.msra.mxu0 0
        %981 = vmatprep.subr.bf16.mxu0 0
        %982 = vmatpush1.bf16.msra.mxu0 0
        %983 = vmatprep.subr.bf16.mxu0 0
        %984 = vmatpush1.bf16.msra.mxu0 0
        %985 = vmatprep.mubr.bf16.mxu0 0
        %986 = vmatmul.mubr.bf16.gmra.mrb[0].mxu0 %v948
        %v987 = vpop.f32.mrb[0].mxu0
        %v988 = vadd.f32 0.0, %v987
        %v989 = vpop.f32.mrb[0].mxu0
        %v990 = vpop.f32.mrb[0].mxu0
        %v991 = vpop.f32.mrb[0].mxu0
        %992 = vdwg.mxu0
        %994 = vrot.lane.b32.xlu0 %v892, 8
        %v995 = vpop.permute.xlu0 %994
        %998 = vrot.lane.b32.xlu0 %v940, 16
        %v999 = vpop.permute.xlu0 %998
        %1002 = vrot.lane.b32.xlu0 %v988, 24
        %v1003 = vpop.permute.xlu0 %1002
        %v1005 = vsel %vm550, %v844, %v995
        %vm1006 = vcmask 130048
        %v1007 = vsel %vm1006, %v1005, %v999
        %vm1008 = vcmask 195584
        %v1009 = vsel %vm1008, %v1007, %v1003
        %v1010 = vpack.c.bf16 %v1009, %v1009
        %v1011 = vld [vmem:[%s4] sm:$0xf]
        %v1012 = vld [vmem:[%s4 + $0x4] sm:$0xf]
        %v1013 = vld [vmem:[%s4 + $0x8] sm:$0xf]
        %v1014 = vld [vmem:[%s4 + $0xc] sm:$0xf]
        %v1019 = vunpack.c.l.b16 %v1011
        %v1020 = vunpack.c.l.b16 %v1012
        %v1021 = vunpack.c.l.b16 %v1013
        %v1022 = vunpack.c.l.b16 %v1014
        %v1023 = vpack.c.b16 %v1020, %v1019
        %v1024 = vpack.c.b16 %v1022, %v1021
        %v1028 = vsel %vm448, %v1010, 0
        %1030 = vmatprep.subr.bf16.mxu0 0
        %1031 = vmatpush1.bf16.msra.mxu0 %v1023
        %1032 = vmatprep.subr.bf16.mxu0 0
        %1033 = vmatpush1.bf16.msra.mxu0 %v1024
        %1034 = vmatprep.subr.bf16.mxu0 0
        %1035 = vmatpush1.bf16.msra.mxu0 0
        %1036 = vmatprep.subr.bf16.mxu0 0
        %1037 = vmatpush1.bf16.msra.mxu0 0
        %1038 = vmatprep.subr.bf16.mxu0 0
        %1039 = vmatpush1.bf16.msra.mxu0 0
        %1040 = vmatprep.subr.bf16.mxu0 0
        %1041 = vmatpush1.bf16.msra.mxu0 0
        %1042 = vmatprep.subr.bf16.mxu0 0
        %1043 = vmatpush1.bf16.msra.mxu0 0
        %1044 = vmatprep.subr.bf16.mxu0 0
        %1045 = vmatpush1.bf16.msra.mxu0 0
        %1046 = vmatprep.subr.bf16.mxu0 0
        %1047 = vmatpush1.bf16.msra.mxu0 0
        %1048 = vmatprep.subr.bf16.mxu0 0
        %1049 = vmatpush1.bf16.msra.mxu0 0
        %1050 = vmatprep.subr.bf16.mxu0 0
        %1051 = vmatpush1.bf16.msra.mxu0 0
        %1052 = vmatprep.subr.bf16.mxu0 0
        %1053 = vmatpush1.bf16.msra.mxu0 0
        %1054 = vmatprep.subr.bf16.mxu0 0
        %1055 = vmatpush1.bf16.msra.mxu0 0
        %1056 = vmatprep.subr.bf16.mxu0 0
        %1057 = vmatpush1.bf16.msra.mxu0 0
        %1058 = vmatprep.subr.bf16.mxu0 0
        %1059 = vmatpush1.bf16.msra.mxu0 0
        %1060 = vmatprep.subr.bf16.mxu0 0
        %1061 = vmatpush1.bf16.msra.mxu0 0
        %1062 = vmatprep.mubr.bf16.mxu0 0
        %1063 = vmatmul.mubr.bf16.gmra.mrb[0].mxu0 %v1028
        %v1064 = vpop.f32.mrb[0].mxu0
        %v1065 = vadd.f32 0.0, %v1064
        %v1066 = vpop.f32.mrb[0].mxu0
        %v1067 = vpop.f32.mrb[0].mxu0
        %v1068 = vpop.f32.mrb[0].mxu0
        %1069 = vdwg.mxu0
        %v1070 = vadd.f32 %v438, %v1065
        %v1071 = vsel %vm448, %v1070, 0.0
        %1072 = vadd.xlane.f32.xlu0 %v1071
        %v1073 = vpop.xlane.xlu0 %1072
        %v1074 = vmul.f32 %v1073, %v452
        %v1075 = vsub.f32 %v1070, %v1074
        %v1076 = vmul.f32 %v1075, %v1075
        %v1077 = vsel %vm448, %v1076, 0.0
        %1078 = vadd.xlane.f32.xlu0 %v1077
        %v1079 = vpop.xlane.xlu0 %1078
        %v1080 = vmul.f32 %v1079, %v452
        %v1081 = vadd.f32 %v1080, 1e-05
        %v1082 = vrsqrt.pop %v1081
        %v1083 = vmul.f32 %v1075, %v1082
        %v1084 = vlaneseq
        %v1085 = vshrl.u32 %v1084, 7
        %v1086 = vsub.s32 2, %v1085
        %v1087 = vrot.slane %v447, %v1086
        %v1088 = vmul.f32 %v1083, %v1087
        %v1089 = vlaneseq
        %v1090 = vshrl.u32 %v1089, 7
        %v1091 = vsub.s32 3, %v1090
        %v1092 = vrot.slane %v447, %v1091
        %v1093 = vadd.f32 %v1088, %v1092
        %v1094 = vpack.c.bf16 %v1093, %v1093
        %v1095 = vld [vmem:[%s5] sm:$0xf]
        %v1096 = vld [vmem:[%s5 + $0x4] sm:$0xf]
        %v1097 = vld [vmem:[%s5 + $0x8] sm:$0xf]
        %v1098 = vld [vmem:[%s5 + $0xc] sm:$0xf]
        %v1099 = vlaneseq
        %v1100 = vshrl.u32 %v1099, 7
        %v1101 = vsub.s32 5, %v1100
        %v1102 = vrot.slane %v447, %v1101
        %v1107 = vunpack.c.l.b16 %v1095
        %v1108 = vunpack.c.l.b16 %v1096
        %v1109 = vunpack.c.l.b16 %v1097
        %v1110 = vunpack.c.l.b16 %v1098
        %v1111 = vpack.c.b16 %v1108, %v1107
        %v1112 = vpack.c.b16 %v1110, %v1109
        %v1116 = vsel %vm448, %v1094, 0
        %1118 = vmatprep.subr.bf16.mxu0 0
        %1119 = vmatpush1.bf16.msra.mxu0 %v1111
        %1120 = vmatprep.subr.bf16.mxu0 0
        %1121 = vmatpush1.bf16.msra.mxu0 %v1112
        %1122 = vmatprep.subr.bf16.mxu0 0
        %1123 = vmatpush1.bf16.msra.mxu0 0
        %1124 = vmatprep.subr.bf16.mxu0 0
        %1125 = vmatpush1.bf16.msra.mxu0 0
        %1126 = vmatprep.subr.bf16.mxu0 0
        %1127 = vmatpush1.bf16.msra.mxu0 0
        %1128 = vmatprep.subr.bf16.mxu0 0
        %1129 = vmatpush1.bf16.msra.mxu0 0
        %1130 = vmatprep.subr.bf16.mxu0 0
        %1131 = vmatpush1.bf16.msra.mxu0 0
        %1132 = vmatprep.subr.bf16.mxu0 0
        %1133 = vmatpush1.bf16.msra.mxu0 0
        %1134 = vmatprep.subr.bf16.mxu0 0
        %1135 = vmatpush1.bf16.msra.mxu0 0
        %1136 = vmatprep.subr.bf16.mxu0 0
        %1137 = vmatpush1.bf16.msra.mxu0 0
        %1138 = vmatprep.subr.bf16.mxu0 0
        %1139 = vmatpush1.bf16.msra.mxu0 0
        %1140 = vmatprep.subr.bf16.mxu0 0
        %1141 = vmatpush1.bf16.msra.mxu0 0
        %1142 = vmatprep.subr.bf16.mxu0 0
        %1143 = vmatpush1.bf16.msra.mxu0 0
        %1144 = vmatprep.subr.bf16.mxu0 0
        %1145 = vmatpush1.bf16.msra.mxu0 0
        %1146 = vmatprep.subr.bf16.mxu0 0
        %1147 = vmatpush1.bf16.msra.mxu0 0
        %1148 = vmatprep.subr.bf16.mxu0 0
        %1149 = vmatpush1.bf16.msra.mxu0 0
        %1150 = vmatprep.mubr.bf16.mxu0 0
        %1151 = vmatmul.mubr.bf16.gmra.mrb[0].mxu0 %v1116
        %v1152 = vpop.f32.mrb[0].mxu0
        %v1153 = vadd.f32 %v1102, %v1152
        %v1154 = vpop.f32.mrb[0].mxu0
        %v1155 = vpop.f32.mrb[0].mxu0
        %v1156 = vpop.f32.mrb[0].mxu0
        %1157 = vdwg.mxu0
        %v1158 = vmax.f32 %v1153, 0.0
        %v1159 = vpack.c.bf16 %v1158, %v1158
        %v1160 = vld [vmem:[%s6] sm:$0xf]
        %v1161 = vld [vmem:[%s6 + $0x4] sm:$0xf]
        %v1162 = vld [vmem:[%s6 + $0x8] sm:$0xf]
        %v1163 = vld [vmem:[%s6 + $0xc] sm:$0xf]
        %v1164 = vld [vmem:[%s6 + $0x10] sm:$0xf]
        %v1165 = vld [vmem:[%s6 + $0x14] sm:$0xf]
        %v1166 = vld [vmem:[%s6 + $0x18] sm:$0xf]
        %v1167 = vld [vmem:[%s6 + $0x1c] sm:$0xf]
        %v1168 = vlaneseq
        %v1169 = vshrl.u32 %v1168, 7
        %v1170 = vsub.s32 4, %v1169
        %v1171 = vrot.slane %v447, %v1170
        %v1180 = vunpack.c.l.b16 %v1160
        %v1181 = vunpack.c.l.b16 %v1161
        %v1182 = vunpack.c.l.b16 %v1162
        %v1183 = vunpack.c.l.b16 %v1163
        %v1184 = vunpack.c.l.b16 %v1164
        %v1185 = vunpack.c.l.b16 %v1165
        %v1186 = vunpack.c.l.b16 %v1166
        %v1187 = vunpack.c.l.b16 %v1167
        %v1188 = vpack.c.b16 %v1181, %v1180
        %v1189 = vpack.c.b16 %v1183, %v1182
        %v1190 = vpack.c.b16 %v1185, %v1184
        %v1191 = vpack.c.b16 %v1187, %v1186
        %v1197 = vsel %vm399, %v1159, 0
        %1199 = vmatprep.subr.bf16.mxu0 0
        %1200 = vmatpush1.bf16.msra.mxu0 %v1188
        %1201 = vmatprep.subr.bf16.mxu0 0
        %1202 = vmatpush1.bf16.msra.mxu0 %v1189
        %1203 = vmatprep.subr.bf16.mxu0 0
        %1204 = vmatpush1.bf16.msra.mxu0 %v1190
        %1205 = vmatprep.subr.bf16.mxu0 0
        %1206 = vmatpush1.bf16.msra.mxu0 %v1191
        %1207 = vmatprep.subr.bf16.mxu0 0
        %1208 = vmatpush1.bf16.msra.mxu0 0
        %1209 = vmatprep.subr.bf16.mxu0 0
        %1210 = vmatpush1.bf16.msra.mxu0 0
        %1211 = vmatprep.subr.bf16.mxu0 0
        %1212 = vmatpush1.bf16.msra.mxu0 0
        %1213 = vmatprep.subr.bf16.mxu0 0
        %1214 = vmatpush1.bf16.msra.mxu0 0
        %1215 = vmatprep.subr.bf16.mxu0 0
        %1216 = vmatpush1.bf16.msra.mxu0 0
        %1217 = vmatprep.subr.bf16.mxu0 0
        %1218 = vmatpush1.bf16.msra.mxu0 0
        %1219 = vmatprep.subr.bf16.mxu0 0
        %1220 = vmatpush1.bf16.msra.mxu0 0
        %1221 = vmatprep.subr.bf16.mxu0 0
        %1222 = vmatpush1.bf16.msra.mxu0 0
        %1223 = vmatprep.subr.bf16.mxu0 0
        %1224 = vmatpush1.bf16.msra.mxu0 0
        %1225 = vmatprep.subr.bf16.mxu0 0
        %1226 = vmatpush1.bf16.msra.mxu0 0
        %1227 = vmatprep.subr.bf16.mxu0 0
        %1228 = vmatpush1.bf16.msra.mxu0 0
        %1229 = vmatprep.subr.bf16.mxu0 0
        %1230 = vmatpush1.bf16.msra.mxu0 0
        %1231 = vmatprep.mubr.bf16.mxu0 0
        %1232 = vmatmul.mubr.bf16.gmra.mrb[0].mxu0 %v1197
        %v1233 = vpop.f32.mrb[0].mxu0
        %v1234 = vadd.f32 %v1171, %v1233
        %v1235 = vpop.f32.mrb[0].mxu0
        %v1236 = vpop.f32.mrb[0].mxu0
        %v1237 = vpop.f32.mrb[0].mxu0
        %1238 = vdwg.mxu0
        %v1239 = vadd.f32 %v1070, %v1234
        %s1240 = scalar_lea.vmem %s7, 8
        %v1241 = vld [vmem:[%s1240] sm:$0x3f]
        %v1242 = vsel %vm448, %v1239, 0.0
        %1243 = vadd.xlane.f32.xlu0 %v1242
        %v1244 = vpop.xlane.xlu0 %1243
        %v1245 = vmul.f32 %v1244, %v452
        %v1246 = vsub.f32 %v1239, %v1245
        %v1247 = vmul.f32 %v1246, %v1246
        %v1248 = vsel %vm448, %v1247, 0.0
        %1249 = vadd.xlane.f32.xlu0 %v1248
        %v1250 = vpop.xlane.xlu0 %1249
        %v1251 = vmul.f32 %v1250, %v452
        %v1252 = vadd.f32 %v1251, 1e-05
        %v1253 = vrsqrt.pop %v1252
        %v1254 = vmul.f32 %v1246, %v1253
        %v1255 = vlaneseq
        %v1256 = vshrl.u32 %v1255, 7
        %v1257 = vsub.s32 0, %v1256
        %v1258 = vrot.slane %v1241, %v1257
        %v1259 = vmul.f32 %v1254, %v1258
        %v1260 = vlaneseq
        %v1261 = vshrl.u32 %v1260, 7
        %v1262 = vsub.s32 1, %v1261
        %v1263 = vrot.slane %v1241, %v1262
        %v1264 = vadd.f32 %v1259, %v1263
        %v1265 = vpack.c.bf16 %v1264, %v1264
        %s1266 = scalar_lea.vmem %s3, 16
        %v1267 = vld [vmem:[%s1266] sm:$0xf]
        %v1268 = vld [vmem:[%s1266 + $0x4] sm:$0xf]
        %v1269 = vld [vmem:[%s1266 + $0x8] sm:$0xf]
        %v1270 = vld [vmem:[%s1266 + $0xc] sm:$0xf]
        %v1275 = vunpack.c.l.b16 %v1267
        %v1276 = vunpack.c.l.b16 %v1268
        %v1277 = vunpack.c.l.b16 %v1269
        %v1278 = vunpack.c.l.b16 %v1270
        %v1279 = vpack.c.b16 %v1276, %v1275
        %v1280 = vpack.c.b16 %v1278, %v1277
        %v1284 = vsel %vm448, %v1265, 0
        %1286 = vmatprep.subr.bf16.mxu0 0
        %1287 = vmatpush1.bf16.msra.mxu0 %v1279
        %1288 = vmatprep.subr.bf16.mxu0 0
        %1289 = vmatpush1.bf16.msra.mxu0 %v1280
        %1290 = vmatprep.subr.bf16.mxu0 0
        %1291 = vmatpush1.bf16.msra.mxu0 0
        %1292 = vmatprep.subr.bf16.mxu0 0
        %1293 = vmatpush1.bf16.msra.mxu0 0
        %1294 = vmatprep.subr.bf16.mxu0 0
        %1295 = vmatpush1.bf16.msra.mxu0 0
        %1296 = vmatprep.subr.bf16.mxu0 0
        %1297 = vmatpush1.bf16.msra.mxu0 0
        %1298 = vmatprep.subr.bf16.mxu0 0
        %1299 = vmatpush1.bf16.msra.mxu0 0
        %1300 = vmatprep.subr.bf16.mxu0 0
        %1301 = vmatpush1.bf16.msra.mxu0 0
        %1302 = vmatprep.subr.bf16.mxu0 0
        %1303 = vmatpush1.bf16.msra.mxu0 0
        %1304 = vmatprep.subr.bf16.mxu0 0
        %1305 = vmatpush1.bf16.msra.mxu0 0
        %1306 = vmatprep.subr.bf16.mxu0 0
        %1307 = vmatpush1.bf16.msra.mxu0 0
        %1308 = vmatprep.subr.bf16.mxu0 0
        %1309 = vmatpush1.bf16.msra.mxu0 0
        %1310 = vmatprep.subr.bf16.mxu0 0
        %1311 = vmatpush1.bf16.msra.mxu0 0
        %1312 = vmatprep.subr.bf16.mxu0 0
        %1313 = vmatpush1.bf16.msra.mxu0 0
        %1314 = vmatprep.subr.bf16.mxu0 0
        %1315 = vmatpush1.bf16.msra.mxu0 0
        %1316 = vmatprep.subr.bf16.mxu0 0
        %1317 = vmatpush1.bf16.msra.mxu0 0
        %1318 = vmatprep.mubr.bf16.mxu0 0
        %1319 = vmatmul.mubr.bf16.gmra.mrb[0].mxu0 %v1284
        %v1320 = vpop.f32.mrb[0].mxu0
        %v1321 = vadd.f32 0.0, %v1320
        %v1322 = vpop.f32.mrb[0].mxu0
        %v1323 = vpop.f32.mrb[0].mxu0
        %v1324 = vpop.f32.mrb[0].mxu0
        %1325 = vdwg.mxu0
        %1327 = vrot.lane.b32.xlu0 %v1321, 120
        %v1328 = vpop.permute.xlu0 %1327
        %1330 = vrot.lane.b32.xlu0 %v1321, 112
        %v1331 = vpop.permute.xlu0 %1330
        %1333 = vrot.lane.b32.xlu0 %v1321, 104
        %v1334 = vpop.permute.xlu0 %1333
        %v1336 = vpack.c.bf16 %v1321, %v1321
        %v1337 = vpack.c.bf16 %v1328, %v1328
        %v1338 = vpack.c.bf16 %v1331, %v1331
        %v1339 = vpack.c.bf16 %v1334, %v1334
        %1341 = vrot.lane.b32.xlu0 %v1336, 96
        %v1342 = vpop.permute.xlu0 %1341
        %v1344 = vsel %vm550, %v1336, 0
        %v1347 = vsel %vm550, %v1342, 0
        %1349 = vmatprep.subr.bf16.mxu0 0
        %1350 = vmatpush1.bf16.xpose.msra.mxu0 %v1347
        %1351 = vmatprep.subr.bf16.mxu0 0
        %1352 = vmatpush1.bf16.xpose.msra.mxu0 0
        %1353 = vmatprep.subr.bf16.mxu0 0
        %1354 = vmatpush1.bf16.xpose.msra.mxu0 0
        %1355 = vmatprep.subr.bf16.mxu0 0
        %1356 = vmatpush1.bf16.xpose.msra.mxu0 0
        %1357 = vmatprep.subr.bf16.mxu0 0
        %1358 = vmatpush1.bf16.xpose.msra.mxu0 0
        %1359 = vmatprep.subr.bf16.mxu0 0
        %1360 = vmatpush1.bf16.xpose.msra.mxu0 0
        %1361 = vmatprep.subr.bf16.mxu0 0
        %1362 = vmatpush1.bf16.xpose.msra.mxu0 0
        %1363 = vmatprep.subr.bf16.mxu0 0
        %1364 = vmatpush1.bf16.xpose.msra.mxu0 0
        %1365 = vmatprep.subr.bf16.mxu0 0
        %1366 = vmatpush1.bf16.xpose.msra.mxu0 0
        %1367 = vmatprep.subr.bf16.mxu0 0
        %1368 = vmatpush1.bf16.xpose.msra.mxu0 0
        %1369 = vmatprep.subr.bf16.mxu0 0
        %1370 = vmatpush1.bf16.xpose.msra.mxu0 0
        %1371 = vmatprep.subr.bf16.mxu0 0
        %1372 = vmatpush1.bf16.xpose.msra.mxu0 0
        %1373 = vmatprep.subr.bf16.mxu0 0
        %1374 = vmatpush1.bf16.xpose.msra.mxu0 0
        %1375 = vmatprep.subr.bf16.mxu0 0
        %1376 = vmatpush1.bf16.xpose.msra.mxu0 0
        %1377 = vmatprep.subr.bf16.mxu0 0
        %1378 = vmatpush1.bf16.xpose.msra.mxu0 0
        %1379 = vmatprep.subr.bf16.mxu0 0
        %1380 = vmatpush1.bf16.xpose.msra.mxu0 0
        %1381 = vmatprep.mubr.bf16.mxu0 0
        %1382 = vmatmul.mubr.bf16.gmra.mrb[0].mxu0 %v1344
        %v1383 = vpop.f32.mrb[0].mxu0
        %v1384 = vadd.f32 0.0, %v1383
        %v1385 = vpop.f32.mrb[0].mxu0
        %v1386 = vpop.f32.mrb[0].mxu0
        %v1387 = vpop.f32.mrb[0].mxu0
        %1388 = vdwg.mxu0
        %1390 = vrot.lane.b32.xlu0 %v1337, 96
        %v1391 = vpop.permute.xlu0 %1390
        %v1393 = vsel %vm550, %v1337, 0
        %v1396 = vsel %vm550, %v1391, 0
        %1398 = vmatprep.subr.bf16.mxu0 0
        %1399 = vmatpush1.bf16.xpose.msra.mxu0 %v1396
        %1400 = vmatprep.subr.bf16.mxu0 0
        %1401 = vmatpush1.bf16.xpose.msra.mxu0 0
        %1402 = vmatprep.subr.bf16.mxu0 0
        %1403 = vmatpush1.bf16.xpose.msra.mxu0 0
        %1404 = vmatprep.subr.bf16.mxu0 0
        %1405 = vmatpush1.bf16.xpose.msra.mxu0 0
        %1406 = vmatprep.subr.bf16.mxu0 0
        %1407 = vmatpush1.bf16.xpose.msra.mxu0 0
        %1408 = vmatprep.subr.bf16.mxu0 0
        %1409 = vmatpush1.bf16.xpose.msra.mxu0 0
        %1410 = vmatprep.subr.bf16.mxu0 0
        %1411 = vmatpush1.bf16.xpose.msra.mxu0 0
        %1412 = vmatprep.subr.bf16.mxu0 0
        %1413 = vmatpush1.bf16.xpose.msra.mxu0 0
        %1414 = vmatprep.subr.bf16.mxu0 0
        %1415 = vmatpush1.bf16.xpose.msra.mxu0 0
        %1416 = vmatprep.subr.bf16.mxu0 0
        %1417 = vmatpush1.bf16.xpose.msra.mxu0 0
        %1418 = vmatprep.subr.bf16.mxu0 0
        %1419 = vmatpush1.bf16.xpose.msra.mxu0 0
        %1420 = vmatprep.subr.bf16.mxu0 0
        %1421 = vmatpush1.bf16.xpose.msra.mxu0 0
        %1422 = vmatprep.subr.bf16.mxu0 0
        %1423 = vmatpush1.bf16.xpose.msra.mxu0 0
        %1424 = vmatprep.subr.bf16.mxu0 0
        %1425 = vmatpush1.bf16.xpose.msra.mxu0 0
        %1426 = vmatprep.subr.bf16.mxu0 0
        %1427 = vmatpush1.bf16.xpose.msra.mxu0 0
        %1428 = vmatprep.subr.bf16.mxu0 0
        %1429 = vmatpush1.bf16.xpose.msra.mxu0 0
        %1430 = vmatprep.mubr.bf16.mxu0 0
        %1431 = vmatmul.mubr.bf16.gmra.mrb[0].mxu0 %v1393
        %v1432 = vpop.f32.mrb[0].mxu0
        %v1433 = vadd.f32 0.0, %v1432
        %v1434 = vpop.f32.mrb[0].mxu0
        %v1435 = vpop.f32.mrb[0].mxu0
        %v1436 = vpop.f32.mrb[0].mxu0
        %1437 = vdwg.mxu0
        %1439 = vrot.lane.b32.xlu0 %v1338, 96
        %v1440 = vpop.permute.xlu0 %1439
        %v1442 = vsel %vm550, %v1338, 0
        %v1445 = vsel %vm550, %v1440, 0
        %1447 = vmatprep.subr.bf16.mxu0 0
        %1448 = vmatpush1.bf16.xpose.msra.mxu0 %v1445
        %1449 = vmatprep.subr.bf16.mxu0 0
        %1450 = vmatpush1.bf16.xpose.msra.mxu0 0
        %1451 = vmatprep.subr.bf16.mxu0 0
        %1452 = vmatpush1.bf16.xpose.msra.mxu0 0
        %1453 = vmatprep.subr.bf16.mxu0 0
        %1454 = vmatpush1.bf16.xpose.msra.mxu0 0
        %1455 = vmatprep.subr.bf16.mxu0 0
        %1456 = vmatpush1.bf16.xpose.msra.mxu0 0
        %1457 = vmatprep.subr.bf16.mxu0 0
        %1458 = vmatpush1.bf16.xpose.msra.mxu0 0
        %1459 = vmatprep.subr.bf16.mxu0 0
        %1460 = vmatpush1.bf16.xpose.msra.mxu0 0
        %1461 = vmatprep.subr.bf16.mxu0 0
        %1462 = vmatpush1.bf16.xpose.msra.mxu0 0
        %1463 = vmatprep.subr.bf16.mxu0 0
        %1464 = vmatpush1.bf16.xpose.msra.mxu0 0
        %1465 = vmatprep.subr.bf16.mxu0 0
        %1466 = vmatpush1.bf16.xpose.msra.mxu0 0
        %1467 = vmatprep.subr.bf16.mxu0 0
        %1468 = vmatpush1.bf16.xpose.msra.mxu0 0
        %1469 = vmatprep.subr.bf16.mxu0 0
        %1470 = vmatpush1.bf16.xpose.msra.mxu0 0
        %1471 = vmatprep.subr.bf16.mxu0 0
        %1472 = vmatpush1.bf16.xpose.msra.mxu0 0
        %1473 = vmatprep.subr.bf16.mxu0 0
        %1474 = vmatpush1.bf16.xpose.msra.mxu0 0
        %1475 = vmatprep.subr.bf16.mxu0 0
        %1476 = vmatpush1.bf16.xpose.msra.mxu0 0
        %1477 = vmatprep.subr.bf16.mxu0 0
        %1478 = vmatpush1.bf16.xpose.msra.mxu0 0
        %1479 = vmatprep.mubr.bf16.mxu0 0
        %1480 = vmatmul.mubr.bf16.gmra.mrb[0].mxu0 %v1442
        %v1481 = vpop.f32.mrb[0].mxu0
        %v1482 = vadd.f32 0.0, %v1481
        %v1483 = vpop.f32.mrb[0].mxu0
        %v1484 = vpop.f32.mrb[0].mxu0
        %v1485 = vpop.f32.mrb[0].mxu0
        %1486 = vdwg.mxu0
        %1488 = vrot.lane.b32.xlu0 %v1339, 96
        %v1489 = vpop.permute.xlu0 %1488
        %v1491 = vsel %vm550, %v1339, 0
        %v1494 = vsel %vm550, %v1489, 0
        %1496 = vmatprep.subr.bf16.mxu0 0
        %1497 = vmatpush1.bf16.xpose.msra.mxu0 %v1494
        %1498 = vmatprep.subr.bf16.mxu0 0
        %1499 = vmatpush1.bf16.xpose.msra.mxu0 0
        %1500 = vmatprep.subr.bf16.mxu0 0
        %1501 = vmatpush1.bf16.xpose.msra.mxu0 0
        %1502 = vmatprep.subr.bf16.mxu0 0
        %1503 = vmatpush1.bf16.xpose.msra.mxu0 0
        %1504 = vmatprep.subr.bf16.mxu0 0
        %1505 = vmatpush1.bf16.xpose.msra.mxu0 0
        %1506 = vmatprep.subr.bf16.mxu0 0
        %1507 = vmatpush1.bf16.xpose.msra.mxu0 0
        %1508 = vmatprep.subr.bf16.mxu0 0
        %1509 = vmatpush1.bf16.xpose.msra.mxu0 0
        %1510 = vmatprep.subr.bf16.mxu0 0
        %1511 = vmatpush1.bf16.xpose.msra.mxu0 0
        %1512 = vmatprep.subr.bf16.mxu0 0
        %1513 = vmatpush1.bf16.xpose.msra.mxu0 0
        %1514 = vmatprep.subr.bf16.mxu0 0
        %1515 = vmatpush1.bf16.xpose.msra.mxu0 0
        %1516 = vmatprep.subr.bf16.mxu0 0
        %1517 = vmatpush1.bf16.xpose.msra.mxu0 0
        %1518 = vmatprep.subr.bf16.mxu0 0
        %1519 = vmatpush1.bf16.xpose.msra.mxu0 0
        %1520 = vmatprep.subr.bf16.mxu0 0
        %1521 = vmatpush1.bf16.xpose.msra.mxu0 0
        %1522 = vmatprep.subr.bf16.mxu0 0
        %1523 = vmatpush1.bf16.xpose.msra.mxu0 0
        %1524 = vmatprep.subr.bf16.mxu0 0
        %1525 = vmatpush1.bf16.xpose.msra.mxu0 0
        %1526 = vmatprep.subr.bf16.mxu0 0
        %1527 = vmatpush1.bf16.xpose.msra.mxu0 0
        %1528 = vmatprep.mubr.bf16.mxu0 0
        %1529 = vmatmul.mubr.bf16.gmra.mrb[0].mxu0 %v1491
        %v1530 = vpop.f32.mrb[0].mxu0
        %v1531 = vadd.f32 0.0, %v1530
        %v1532 = vpop.f32.mrb[0].mxu0
        %v1533 = vpop.f32.mrb[0].mxu0
        %v1534 = vpop.f32.mrb[0].mxu0
        %1535 = vdwg.mxu0
        %v1536 = vmul.f32 %v1384, 0.35355338
        %v1537 = vmul.f32 %v1433, 0.35355338
        %v1538 = vmul.f32 %v1482, 0.35355338
        %v1539 = vmul.f32 %v1531, 0.35355338
        %v1540 = vadd.f32 %v1536, %v446
        %v1541 = vadd.f32 %v1537, %v446
        %v1542 = vadd.f32 %v1538, %v446
        %v1543 = vadd.f32 %v1539, %v446
        %v1544 = vsel %vm550, %v1540, -inf
        %1545 = vmax.xlane.f32.xlu0 %v1544
        %v1546 = vpop.xlane.xlu0 %1545
        %v1547 = vsel %vm550, %v1541, -inf
        %1548 = vmax.xlane.f32.xlu0 %v1547
        %v1549 = vpop.xlane.xlu0 %1548
        %v1550 = vsel %vm550, %v1542, -inf
        %1551 = vmax.xlane.f32.xlu0 %v1550
        %v1552 = vpop.xlane.xlu0 %1551
        %v1553 = vsel %vm550, %v1543, -inf
        %1554 = vmax.xlane.f32.xlu0 %v1553
        %v1555 = vpop.xlane.xlu0 %1554
        %v1556 = vsub.f32 %v1540, %v1546
        %v1557 = vsub.f32 %v1541, %v1549
        %v1558 = vsub.f32 %v1542, %v1552
        %v1559 = vsub.f32 %v1543, %v1555
        %v1560 = vmul.f32 %v1556, 1.442695
        %v1561 = vpow.pop %v1560
        %v1562 = vmul.f32 %v1557, 1.442695
        %v1563 = vpow.pop %v1562
        %v1564 = vmul.f32 %v1558, 1.442695
        %v1565 = vpow.pop %v1564
        %v1566 = vmul.f32 %v1559, 1.442695
        %v1567 = vpow.pop %v1566
        %v1568 = vsel %vm550, %v1561, 0.0
        %1569 = vadd.xlane.f32.xlu0 %v1568
        %v1570 = vpop.xlane.xlu0 %1569
        %v1571 = vsel %vm550, %v1563, 0.0
        %1572 = vadd.xlane.f32.xlu0 %v1571
        %v1573 = vpop.xlane.xlu0 %1572
        %v1574 = vsel %vm550, %v1565, 0.0
        %1575 = vadd.xlane.f32.xlu0 %v1574
        %v1576 = vpop.xlane.xlu0 %1575
        %v1577 = vsel %vm550, %v1567, 0.0
        %1578 = vadd.xlane.f32.xlu0 %v1577
        %v1579 = vpop.xlane.xlu0 %1578
        %v1580 = vrcp.pop %v1570
        %v1581 = vrcp.pop %v1573
        %v1582 = vrcp.pop %v1576
        %v1583 = vrcp.pop %v1579
        %v1584 = vmul.f32 %v1561, %v1580
        %v1585 = vmul.f32 %v1563, %v1581
        %v1586 = vmul.f32 %v1565, %v1582
        %v1587 = vmul.f32 %v1567, %v1583
        %v1588 = vpack.c.bf16 %v1584, %v1584
        %v1589 = vpack.c.bf16 %v1585, %v1585
        %v1590 = vpack.c.bf16 %v1586, %v1586
        %v1591 = vpack.c.bf16 %v1587, %v1587
        %1592 = vrot.lane.b32.xlu0 %v1336, 64
        %v1593 = vpop.permute.xlu0 %1592
        %v1595 = vsel %vm550, %v1588, 0
        %v1598 = vsel %vm805, %v1593, 0
        %1600 = vmatprep.subr.bf16.mxu0 0
        %1601 = vmatpush1.bf16.msra.mxu0 %v1598
        %1602 = vmatprep.subr.bf16.mxu0 0
        %1603 = vmatpush1.bf16.msra.mxu0 0
        %1604 = vmatprep.subr.bf16.mxu0 0
        %1605 = vmatpush1.bf16.msra.mxu0 0
        %1606 = vmatprep.subr.bf16.mxu0 0
        %1607 = vmatpush1.bf16.msra.mxu0 0
        %1608 = vmatprep.subr.bf16.mxu0 0
        %1609 = vmatpush1.bf16.msra.mxu0 0
        %1610 = vmatprep.subr.bf16.mxu0 0
        %1611 = vmatpush1.bf16.msra.mxu0 0
        %1612 = vmatprep.subr.bf16.mxu0 0
        %1613 = vmatpush1.bf16.msra.mxu0 0
        %1614 = vmatprep.subr.bf16.mxu0 0
        %1615 = vmatpush1.bf16.msra.mxu0 0
        %1616 = vmatprep.subr.bf16.mxu0 0
        %1617 = vmatpush1.bf16.msra.mxu0 0
        %1618 = vmatprep.subr.bf16.mxu0 0
        %1619 = vmatpush1.bf16.msra.mxu0 0
        %1620 = vmatprep.subr.bf16.mxu0 0
        %1621 = vmatpush1.bf16.msra.mxu0 0
        %1622 = vmatprep.subr.bf16.mxu0 0
        %1623 = vmatpush1.bf16.msra.mxu0 0
        %1624 = vmatprep.subr.bf16.mxu0 0
        %1625 = vmatpush1.bf16.msra.mxu0 0
        %1626 = vmatprep.subr.bf16.mxu0 0
        %1627 = vmatpush1.bf16.msra.mxu0 0
        %1628 = vmatprep.subr.bf16.mxu0 0
        %1629 = vmatpush1.bf16.msra.mxu0 0
        %1630 = vmatprep.subr.bf16.mxu0 0
        %1631 = vmatpush1.bf16.msra.mxu0 0
        %1632 = vmatprep.mubr.bf16.mxu0 0
        %1633 = vmatmul.mubr.bf16.gmra.mrb[0].mxu0 %v1595
        %v1634 = vpop.f32.mrb[0].mxu0
        %v1635 = vadd.f32 0.0, %v1634
        %v1636 = vpop.f32.mrb[0].mxu0
        %v1637 = vpop.f32.mrb[0].mxu0
        %v1638 = vpop.f32.mrb[0].mxu0
        %1639 = vdwg.mxu0
        %1640 = vrot.lane.b32.xlu0 %v1337, 64
        %v1641 = vpop.permute.xlu0 %1640
        %v1643 = vsel %vm550, %v1589, 0
        %v1646 = vsel %vm805, %v1641, 0
        %1648 = vmatprep.subr.bf16.mxu0 0
        %1649 = vmatpush1.bf16.msra.mxu0 %v1646
        %1650 = vmatprep.subr.bf16.mxu0 0
        %1651 = vmatpush1.bf16.msra.mxu0 0
        %1652 = vmatprep.subr.bf16.mxu0 0
        %1653 = vmatpush1.bf16.msra.mxu0 0
        %1654 = vmatprep.subr.bf16.mxu0 0
        %1655 = vmatpush1.bf16.msra.mxu0 0
        %1656 = vmatprep.subr.bf16.mxu0 0
        %1657 = vmatpush1.bf16.msra.mxu0 0
        %1658 = vmatprep.subr.bf16.mxu0 0
        %1659 = vmatpush1.bf16.msra.mxu0 0
        %1660 = vmatprep.subr.bf16.mxu0 0
        %1661 = vmatpush1.bf16.msra.mxu0 0
        %1662 = vmatprep.subr.bf16.mxu0 0
        %1663 = vmatpush1.bf16.msra.mxu0 0
        %1664 = vmatprep.subr.bf16.mxu0 0
        %1665 = vmatpush1.bf16.msra.mxu0 0
        %1666 = vmatprep.subr.bf16.mxu0 0
        %1667 = vmatpush1.bf16.msra.mxu0 0
        %1668 = vmatprep.subr.bf16.mxu0 0
        %1669 = vmatpush1.bf16.msra.mxu0 0
        %1670 = vmatprep.subr.bf16.mxu0 0
        %1671 = vmatpush1.bf16.msra.mxu0 0
        %1672 = vmatprep.subr.bf16.mxu0 0
        %1673 = vmatpush1.bf16.msra.mxu0 0
        %1674 = vmatprep.subr.bf16.mxu0 0
        %1675 = vmatpush1.bf16.msra.mxu0 0
        %1676 = vmatprep.subr.bf16.mxu0 0
        %1677 = vmatpush1.bf16.msra.mxu0 0
        %1678 = vmatprep.subr.bf16.mxu0 0
        %1679 = vmatpush1.bf16.msra.mxu0 0
        %1680 = vmatprep.mubr.bf16.mxu0 0
        %1681 = vmatmul.mubr.bf16.gmra.mrb[0].mxu0 %v1643
        %v1682 = vpop.f32.mrb[0].mxu0
        %v1683 = vadd.f32 0.0, %v1682
        %v1684 = vpop.f32.mrb[0].mxu0
        %v1685 = vpop.f32.mrb[0].mxu0
        %v1686 = vpop.f32.mrb[0].mxu0
        %1687 = vdwg.mxu0
        %1688 = vrot.lane.b32.xlu0 %v1338, 64
        %v1689 = vpop.permute.xlu0 %1688
        %v1691 = vsel %vm550, %v1590, 0
        %v1694 = vsel %vm805, %v1689, 0
        %1696 = vmatprep.subr.bf16.mxu0 0
        %1697 = vmatpush1.bf16.msra.mxu0 %v1694
        %1698 = vmatprep.subr.bf16.mxu0 0
        %1699 = vmatpush1.bf16.msra.mxu0 0
        %1700 = vmatprep.subr.bf16.mxu0 0
        %1701 = vmatpush1.bf16.msra.mxu0 0
        %1702 = vmatprep.subr.bf16.mxu0 0
        %1703 = vmatpush1.bf16.msra.mxu0 0
        %1704 = vmatprep.subr.bf16.mxu0 0
        %1705 = vmatpush1.bf16.msra.mxu0 0
        %1706 = vmatprep.subr.bf16.mxu0 0
        %1707 = vmatpush1.bf16.msra.mxu0 0
        %1708 = vmatprep.subr.bf16.mxu0 0
        %1709 = vmatpush1.bf16.msra.mxu0 0
        %1710 = vmatprep.subr.bf16.mxu0 0
        %1711 = vmatpush1.bf16.msra.mxu0 0
        %1712 = vmatprep.subr.bf16.mxu0 0
        %1713 = vmatpush1.bf16.msra.mxu0 0
        %1714 = vmatprep.subr.bf16.mxu0 0
        %1715 = vmatpush1.bf16.msra.mxu0 0
        %1716 = vmatprep.subr.bf16.mxu0 0
        %1717 = vmatpush1.bf16.msra.mxu0 0
        %1718 = vmatprep.subr.bf16.mxu0 0
        %1719 = vmatpush1.bf16.msra.mxu0 0
        %1720 = vmatprep.subr.bf16.mxu0 0
        %1721 = vmatpush1.bf16.msra.mxu0 0
        %1722 = vmatprep.subr.bf16.mxu0 0
        %1723 = vmatpush1.bf16.msra.mxu0 0
        %1724 = vmatprep.subr.bf16.mxu0 0
        %1725 = vmatpush1.bf16.msra.mxu0 0
        %1726 = vmatprep.subr.bf16.mxu0 0
        %1727 = vmatpush1.bf16.msra.mxu0 0
        %1728 = vmatprep.mubr.bf16.mxu0 0
        %1729 = vmatmul.mubr.bf16.gmra.mrb[0].mxu0 %v1691
        %v1730 = vpop.f32.mrb[0].mxu0
        %v1731 = vadd.f32 0.0, %v1730
        %v1732 = vpop.f32.mrb[0].mxu0
        %v1733 = vpop.f32.mrb[0].mxu0
        %v1734 = vpop.f32.mrb[0].mxu0
        %1735 = vdwg.mxu0
        %1736 = vrot.lane.b32.xlu0 %v1339, 64
        %v1737 = vpop.permute.xlu0 %1736
        %v1739 = vsel %vm550, %v1591, 0
        %v1742 = vsel %vm805, %v1737, 0
        %1744 = vmatprep.subr.bf16.mxu0 0
        %1745 = vmatpush1.bf16.msra.mxu0 %v1742
        %1746 = vmatprep.subr.bf16.mxu0 0
        %1747 = vmatpush1.bf16.msra.mxu0 0
        %1748 = vmatprep.subr.bf16.mxu0 0
        %1749 = vmatpush1.bf16.msra.mxu0 0
        %1750 = vmatprep.subr.bf16.mxu0 0
        %1751 = vmatpush1.bf16.msra.mxu0 0
        %1752 = vmatprep.subr.bf16.mxu0 0
        %1753 = vmatpush1.bf16.msra.mxu0 0
        %1754 = vmatprep.subr.bf16.mxu0 0
        %1755 = vmatpush1.bf16.msra.mxu0 0
        %1756 = vmatprep.subr.bf16.mxu0 0
        %1757 = vmatpush1.bf16.msra.mxu0 0
        %1758 = vmatprep.subr.bf16.mxu0 0
        %1759 = vmatpush1.bf16.msra.mxu0 0
        %1760 = vmatprep.subr.bf16.mxu0 0
        %1761 = vmatpush1.bf16.msra.mxu0 0
        %1762 = vmatprep.subr.bf16.mxu0 0
        %1763 = vmatpush1.bf16.msra.mxu0 0
        %1764 = vmatprep.subr.bf16.mxu0 0
        %1765 = vmatpush1.bf16.msra.mxu0 0
        %1766 = vmatprep.subr.bf16.mxu0 0
        %1767 = vmatpush1.bf16.msra.mxu0 0
        %1768 = vmatprep.subr.bf16.mxu0 0
        %1769 = vmatpush1.bf16.msra.mxu0 0
        %1770 = vmatprep.subr.bf16.mxu0 0
        %1771 = vmatpush1.bf16.msra.mxu0 0
        %1772 = vmatprep.subr.bf16.mxu0 0
        %1773 = vmatpush1.bf16.msra.mxu0 0
        %1774 = vmatprep.subr.bf16.mxu0 0
        %1775 = vmatpush1.bf16.msra.mxu0 0
        %1776 = vmatprep.mubr.bf16.mxu0 0
        %1777 = vmatmul.mubr.bf16.gmra.mrb[0].mxu0 %v1739
        %v1778 = vpop.f32.mrb[0].mxu0
        %v1779 = vadd.f32 0.0, %v1778
        %v1780 = vpop.f32.mrb[0].mxu0
        %v1781 = vpop.f32.mrb[0].mxu0
        %v1782 = vpop.f32.mrb[0].mxu0
        %1783 = vdwg.mxu0
        %1785 = vrot.lane.b32.xlu0 %v1683, 8
        %v1786 = vpop.permute.xlu0 %1785
        %1789 = vrot.lane.b32.xlu0 %v1731, 16
        %v1790 = vpop.permute.xlu0 %1789
        %1793 = vrot.lane.b32.xlu0 %v1779, 24
        %v1794 = vpop.permute.xlu0 %1793
        %v1796 = vsel %vm550, %v1635, %v1786
        %v1797 = vsel %vm1006, %v1796, %v1790
        %v1798 = vsel %vm1008, %v1797, %v1794
        %v1799 = vpack.c.bf16 %v1798, %v1798
        %s1800 = scalar_lea.vmem %s4, 16
        %v1801 = vld [vmem:[%s1800] sm:$0xf]
        %v1802 = vld [vmem:[%s1800 + $0x4] sm:$0xf]
        %v1803 = vld [vmem:[%s1800 + $0x8] sm:$0xf]
        %v1804 = vld [vmem:[%s1800 + $0xc] sm:$0xf]
        %v1809 = vunpack.c.l.b16 %v1801
        %v1810 = vunpack.c.l.b16 %v1802
        %v1811 = vunpack.c.l.b16 %v1803
        %v1812 = vunpack.c.l.b16 %v1804
        %v1813 = vpack.c.b16 %v1810, %v1809
        %v1814 = vpack.c.b16 %v1812, %v1811
        %v1818 = vsel %vm448, %v1799, 0
        %1820 = vmatprep.subr.bf16.mxu0 0
        %1821 = vmatpush1.bf16.msra.mxu0 %v1813
        %1822 = vmatprep.subr.bf16.mxu0 0
        %1823 = vmatpush1.bf16.msra.mxu0 %v1814
        %1824 = vmatprep.subr.bf16.mxu0 0
        %1825 = vmatpush1.bf16.msra.mxu0 0
        %1826 = vmatprep.subr.bf16.mxu0 0
        %1827 = vmatpush1.bf16.msra.mxu0 0
        %1828 = vmatprep.subr.bf16.mxu0 0
        %1829 = vmatpush1.bf16.msra.mxu0 0
        %1830 = vmatprep.subr.bf16.mxu0 0
        %1831 = vmatpush1.bf16.msra.mxu0 0
        %1832 = vmatprep.subr.bf16.mxu0 0
        %1833 = vmatpush1.bf16.msra.mxu0 0
        %1834 = vmatprep.subr.bf16.mxu0 0
        %1835 = vmatpush1.bf16.msra.mxu0 0
        %1836 = vmatprep.subr.bf16.mxu0 0
        %1837 = vmatpush1.bf16.msra.mxu0 0
        %1838 = vmatprep.subr.bf16.mxu0 0
        %1839 = vmatpush1.bf16.msra.mxu0 0
        %1840 = vmatprep.subr.bf16.mxu0 0
        %1841 = vmatpush1.bf16.msra.mxu0 0
        %1842 = vmatprep.subr.bf16.mxu0 0
        %1843 = vmatpush1.bf16.msra.mxu0 0
        %1844 = vmatprep.subr.bf16.mxu0 0
        %1845 = vmatpush1.bf16.msra.mxu0 0
        %1846 = vmatprep.subr.bf16.mxu0 0
        %1847 = vmatpush1.bf16.msra.mxu0 0
        %1848 = vmatprep.subr.bf16.mxu0 0
        %1849 = vmatpush1.bf16.msra.mxu0 0
        %1850 = vmatprep.subr.bf16.mxu0 0
        %1851 = vmatpush1.bf16.msra.mxu0 0
        %1852 = vmatprep.mubr.bf16.mxu0 0
        %1853 = vmatmul.mubr.bf16.gmra.mrb[0].mxu0 %v1818
        %v1854 = vpop.f32.mrb[0].mxu0
        %v1855 = vadd.f32 0.0, %v1854
        %v1856 = vpop.f32.mrb[0].mxu0
        %v1857 = vpop.f32.mrb[0].mxu0
        %v1858 = vpop.f32.mrb[0].mxu0
        %1859 = vdwg.mxu0
        %v1860 = vadd.f32 %v1239, %v1855
        %v1861 = vsel %vm448, %v1860, 0.0
        %1862 = vadd.xlane.f32.xlu0 %v1861
        %v1863 = vpop.xlane.xlu0 %1862
        %v1864 = vmul.f32 %v1863, %v452
        %v1865 = vsub.f32 %v1860, %v1864
        %v1866 = vmul.f32 %v1865, %v1865
        %v1867 = vsel %vm448, %v1866, 0.0
        %1868 = vadd.xlane.f32.xlu0 %v1867
        %v1869 = vpop.xlane.xlu0 %1868
        %v1870 = vmul.f32 %v1869, %v452
        %v1871 = vadd.f32 %v1870, 1e-05
        %v1872 = vrsqrt.pop %v1871
        %v1873 = vmul.f32 %v1865, %v1872
        %v1874 = vlaneseq
        %v1875 = vshrl.u32 %v1874, 7
        %v1876 = vsub.s32 2, %v1875
        %v1877 = vrot.slane %v1241, %v1876
        %v1878 = vmul.f32 %v1873, %v1877
        %v1879 = vlaneseq
        %v1880 = vshrl.u32 %v1879, 7
        %v1881 = vsub.s32 3, %v1880
        %v1882 = vrot.slane %v1241, %v1881
        %v1883 = vadd.f32 %v1878, %v1882
        %v1884 = vpack.c.bf16 %v1883, %v1883
        %s1885 = scalar_lea.vmem %s5, 16
        %v1886 = vld [vmem:[%s1885] sm:$0xf]
        %v1887 = vld [vmem:[%s1885 + $0x4] sm:$0xf]
        %v1888 = vld [vmem:[%s1885 + $0x8] sm:$0xf]
        %v1889 = vld [vmem:[%s1885 + $0xc] sm:$0xf]
        %v1890 = vlaneseq
        %v1891 = vshrl.u32 %v1890, 7
        %v1892 = vsub.s32 5, %v1891
        %v1893 = vrot.slane %v1241, %v1892
        %v1898 = vunpack.c.l.b16 %v1886
        %v1899 = vunpack.c.l.b16 %v1887
        %v1900 = vunpack.c.l.b16 %v1888
        %v1901 = vunpack.c.l.b16 %v1889
        %v1902 = vpack.c.b16 %v1899, %v1898
        %v1903 = vpack.c.b16 %v1901, %v1900
        %v1907 = vsel %vm448, %v1884, 0
        %1909 = vmatprep.subr.bf16.mxu0 0
        %1910 = vmatpush1.bf16.msra.mxu0 %v1902
        %1911 = vmatprep.subr.bf16.mxu0 0
        %1912 = vmatpush1.bf16.msra.mxu0 %v1903
        %1913 = vmatprep.subr.bf16.mxu0 0
        %1914 = vmatpush1.bf16.msra.mxu0 0
        %1915 = vmatprep.subr.bf16.mxu0 0
        %1916 = vmatpush1.bf16.msra.mxu0 0
        %1917 = vmatprep.subr.bf16.mxu0 0
        %1918 = vmatpush1.bf16.msra.mxu0 0
        %1919 = vmatprep.subr.bf16.mxu0 0
        %1920 = vmatpush1.bf16.msra.mxu0 0
        %1921 = vmatprep.subr.bf16.mxu0 0
        %1922 = vmatpush1.bf16.msra.mxu0 0
        %1923 = vmatprep.subr.bf16.mxu0 0
        %1924 = vmatpush1.bf16.msra.mxu0 0
        %1925 = vmatprep.subr.bf16.mxu0 0
        %1926 = vmatpush1.bf16.msra.mxu0 0
        %1927 = vmatprep.subr.bf16.mxu0 0
        %1928 = vmatpush1.bf16.msra.mxu0 0
        %1929 = vmatprep.subr.bf16.mxu0 0
        %1930 = vmatpush1.bf16.msra.mxu0 0
        %1931 = vmatprep.subr.bf16.mxu0 0
        %1932 = vmatpush1.bf16.msra.mxu0 0
        %1933 = vmatprep.subr.bf16.mxu0 0
        %1934 = vmatpush1.bf16.msra.mxu0 0
        %1935 = vmatprep.subr.bf16.mxu0 0
        %1936 = vmatpush1.bf16.msra.mxu0 0
        %1937 = vmatprep.subr.bf16.mxu0 0
        %1938 = vmatpush1.bf16.msra.mxu0 0
        %1939 = vmatprep.subr.bf16.mxu0 0
        %1940 = vmatpush1.bf16.msra.mxu0 0
        %1941 = vmatprep.mubr.bf16.mxu0 0
        %1942 = vmatmul.mubr.bf16.gmra.mrb[0].mxu0 %v1907
        %v1943 = vpop.f32.mrb[0].mxu0
        %v1944 = vadd.f32 %v1893, %v1943
        %v1945 = vpop.f32.mrb[0].mxu0
        %v1946 = vpop.f32.mrb[0].mxu0
        %v1947 = vpop.f32.mrb[0].mxu0
        %1948 = vdwg.mxu0
        %v1949 = vmax.f32 %v1944, 0.0
        %v1950 = vpack.c.bf16 %v1949, %v1949
        %s1951 = scalar_lea.vmem %s6, 32
        %v1952 = vld [vmem:[%s1951] sm:$0xf]
        %v1953 = vld [vmem:[%s1951 + $0x4] sm:$0xf]
        %v1954 = vld [vmem:[%s1951 + $0x8] sm:$0xf]
        %v1955 = vld [vmem:[%s1951 + $0xc] sm:$0xf]
        %v1956 = vld [vmem:[%s1951 + $0x10] sm:$0xf]
        %v1957 = vld [vmem:[%s1951 + $0x14] sm:$0xf]
        %v1958 = vld [vmem:[%s1951 + $0x18] sm:$0xf]
        %v1959 = vld [vmem:[%s1951 + $0x1c] sm:$0xf]
        %v1960 = vlaneseq
        %v1961 = vshrl.u32 %v1960, 7
        %v1962 = vsub.s32 4, %v1961
        %v1963 = vrot.slane %v1241, %v1962
        %v1972 = vunpack.c.l.b16 %v1952
        %v1973 = vunpack.c.l.b16 %v1953
        %v1974 = vunpack.c.l.b16 %v1954
        %v1975 = vunpack.c.l.b16 %v1955
        %v1976 = vunpack.c.l.b16 %v1956
        %v1977 = vunpack.c.l.b16 %v1957
        %v1978 = vunpack.c.l.b16 %v1958
        %v1979 = vunpack.c.l.b16 %v1959
        %v1980 = vpack.c.b16 %v1973, %v1972
        %v1981 = vpack.c.b16 %v1975, %v1974
        %v1982 = vpack.c.b16 %v1977, %v1976
        %v1983 = vpack.c.b16 %v1979, %v1978
        %v1989 = vsel %vm399, %v1950, 0
        %1991 = vmatprep.subr.bf16.mxu0 0
        %1992 = vmatpush1.bf16.msra.mxu0 %v1980
        %1993 = vmatprep.subr.bf16.mxu0 0
        %1994 = vmatpush1.bf16.msra.mxu0 %v1981
        %1995 = vmatprep.subr.bf16.mxu0 0
        %1996 = vmatpush1.bf16.msra.mxu0 %v1982
        %1997 = vmatprep.subr.bf16.mxu0 0
        %1998 = vmatpush1.bf16.msra.mxu0 %v1983
        %1999 = vmatprep.subr.bf16.mxu0 0
        %2000 = vmatpush1.bf16.msra.mxu0 0
        %2001 = vmatprep.subr.bf16.mxu0 0
        %2002 = vmatpush1.bf16.msra.mxu0 0
        %2003 = vmatprep.subr.bf16.mxu0 0
        %2004 = vmatpush1.bf16.msra.mxu0 0
        %2005 = vmatprep.subr.bf16.mxu0 0
        %2006 = vmatpush1.bf16.msra.mxu0 0
        %2007 = vmatprep.subr.bf16.mxu0 0
        %2008 = vmatpush1.bf16.msra.mxu0 0
        %2009 = vmatprep.subr.bf16.mxu0 0
        %2010 = vmatpush1.bf16.msra.mxu0 0
        %2011 = vmatprep.subr.bf16.mxu0 0
        %2012 = vmatpush1.bf16.msra.mxu0 0
        %2013 = vmatprep.subr.bf16.mxu0 0
        %2014 = vmatpush1.bf16.msra.mxu0 0
        %2015 = vmatprep.subr.bf16.mxu0 0
        %2016 = vmatpush1.bf16.msra.mxu0 0
        %2017 = vmatprep.subr.bf16.mxu0 0
        %2018 = vmatpush1.bf16.msra.mxu0 0
        %2019 = vmatprep.subr.bf16.mxu0 0
        %2020 = vmatpush1.bf16.msra.mxu0 0
        %2021 = vmatprep.subr.bf16.mxu0 0
        %2022 = vmatpush1.bf16.msra.mxu0 0
        %2023 = vmatprep.mubr.bf16.mxu0 0
        %2024 = vmatmul.mubr.bf16.gmra.mrb[0].mxu0 %v1989
        %v2025 = vpop.f32.mrb[0].mxu0
        %v2026 = vadd.f32 %v1963, %v2025
        %v2027 = vpop.f32.mrb[0].mxu0
        %v2028 = vpop.f32.mrb[0].mxu0
        %v2029 = vpop.f32.mrb[0].mxu0
        %2030 = vdwg.mxu0
        %v2031 = vadd.f32 %v1860, %v2026
        %v2032 = vld [vmem:[%s9] sm:$0x1]
        %v2033 = vld [vmem:[%s9 + $0x1] sm:$0x1]
        %v2034 = vsel %vm448, %v2031, 0.0
        %2035 = vadd.xlane.f32.xlu0 %v2034
        %v2036 = vpop.xlane.xlu0 %2035
        %v2037 = vmul.f32 %v2036, %v452
        %v2038 = vsub.f32 %v2031, %v2037
        %v2039 = vmul.f32 %v2038, %v2038
        %v2040 = vsel %vm448, %v2039, 0.0
        %2041 = vadd.xlane.f32.xlu0 %v2040
        %v2042 = vpop.xlane.xlu0 %2041
        %v2043 = vmul.f32 %v2042, %v452
        %v2044 = vadd.f32 %v2043, 1e-05
        %v2045 = vrsqrt.pop %v2044
        %v2046 = vmul.f32 %v2038, %v2045
        %v2047 = vlaneseq
        %v2048 = vshrl.u32 %v2047, 7
        %v2049 = vsub.s32 0, %v2048
        %v2050 = vrot.slane %v2032, %v2049
        %v2051 = vmul.f32 %v2046, %v2050
        %v2052 = vlaneseq
        %v2053 = vshrl.u32 %v2052, 7
        %v2054 = vsub.s32 0, %v2053
        %v2055 = vrot.slane %v2033, %v2054
        %v2056 = vadd.f32 %v2051, %v2055
        %v2057 = vpack.c.bf16 %v2056, %v2056
        %v2058 = vld [vmem:[%s8] sm:$0xf]
        %v2059 = vld [vmem:[%s8 + $0x4] sm:$0xf]
        %v2060 = vld [vmem:[%s8 + $0x8] sm:$0xf]
        %v2061 = vld [vmem:[%s8 + $0xc] sm:$0xf]
        %v2062 = vld [vmem:[%s9 + $0x2] sm:$0x1]
        %v2063 = vlaneseq
        %v2064 = vshrl.u32 %v2063, 7
        %v2065 = vsub.s32 0, %v2064
        %v2066 = vrot.slane %v2062, %v2065
        %v2071 = vunpack.c.l.b16 %v2058
        %v2072 = vunpack.c.l.b16 %v2059
        %v2073 = vunpack.c.l.b16 %v2060
        %v2074 = vunpack.c.l.b16 %v2061
        %v2075 = vpack.c.b16 %v2072, %v2071
        %v2076 = vpack.c.b16 %v2074, %v2073
        %v2080 = vsel %vm448, %v2057, 0
        %2082 = vmatprep.subr.bf16.mxu0 0
        %2083 = vmatpush1.bf16.msra.mxu0 %v2075
        %2084 = vmatprep.subr.bf16.mxu0 0
        %2085 = vmatpush1.bf16.msra.mxu0 %v2076
        %2086 = vmatprep.subr.bf16.mxu0 0
        %2087 = vmatpush1.bf16.msra.mxu0 0
        %2088 = vmatprep.subr.bf16.mxu0 0
        %2089 = vmatpush1.bf16.msra.mxu0 0
        %2090 = vmatprep.subr.bf16.mxu0 0
        %2091 = vmatpush1.bf16.msra.mxu0 0
        %2092 = vmatprep.subr.bf16.mxu0 0
        %2093 = vmatpush1.bf16.msra.mxu0 0
        %2094 = vmatprep.subr.bf16.mxu0 0
        %2095 = vmatpush1.bf16.msra.mxu0 0
        %2096 = vmatprep.subr.bf16.mxu0 0
        %2097 = vmatpush1.bf16.msra.mxu0 0
        %2098 = vmatprep.subr.bf16.mxu0 0
        %2099 = vmatpush1.bf16.msra.mxu0 0
        %2100 = vmatprep.subr.bf16.mxu0 0
        %2101 = vmatpush1.bf16.msra.mxu0 0
        %2102 = vmatprep.subr.bf16.mxu0 0
        %2103 = vmatpush1.bf16.msra.mxu0 0
        %2104 = vmatprep.subr.bf16.mxu0 0
        %2105 = vmatpush1.bf16.msra.mxu0 0
        %2106 = vmatprep.subr.bf16.mxu0 0
        %2107 = vmatpush1.bf16.msra.mxu0 0
        %2108 = vmatprep.subr.bf16.mxu0 0
        %2109 = vmatpush1.bf16.msra.mxu0 0
        %2110 = vmatprep.subr.bf16.mxu0 0
        %2111 = vmatpush1.bf16.msra.mxu0 0
        %2112 = vmatprep.subr.bf16.mxu0 0
        %2113 = vmatpush1.bf16.msra.mxu0 0
        %2114 = vmatprep.mubr.bf16.mxu0 0
        %2115 = vmatmul.mubr.bf16.gmra.mrb[0].mxu0 %v2080
        %v2116 = vpop.f32.mrb[0].mxu0
        %v2117 = vadd.f32 %v2066, %v2116
        %v2118 = vpop.f32.mrb[0].mxu0
        %v2119 = vpop.f32.mrb[0].mxu0
        %v2120 = vpop.f32.mrb[0].mxu0
        %2121 = vdwg.mxu0
        %2122 = vst [vmem:[%s350] sm:$0xff] %v2117
        %s2123 = sand.u32 %s247, 1
        %s2124 = scalar_lea.sflag [#allocation3], %s2123
        %s2125 = sand.u32 %s247, 1
        %s2126 = smul.addr %s2125, 8
        %s2127 = scalar_lea.vmem [#allocation2], %s2126
        // Predicated region
        $region61: #{tpu_custom_call.1} parent=59 // pred_check
          %p2128 = pneg %p257
        $region62: #{tpu_custom_call.1} parent=59 // pred_check_branch
          %2130 = sbr.rel (%p2128) target = $region64
        $region63: #{tpu_custom_call.1} parent=59 // pred_region
          %s2132 = ssub.s32 128, 128
          %2133 = vsyncadd %s2124, %s2132
          %s2134 = smul.addr %s24, 128
          %s2135 = scalar_lea.hbm %s10, %s2134
          %s2137 = sshll.u32 %s2127, 4
          %s2138 = int_to_ptr.vmem [resolvable:$true] %s2137
          %2140 = dma.vmem_to_hbm [thread:$0]  %s2138, 128, %s2135, %s2124
        $region64: #{tpu_custom_call.1} parent=59 // pred_fallthru
          _
      $region60: #{tpu_custom_call.1} parent=5 // pred_fallthru
        _
      %p2141 = scmp.le.s32.totalorder 2, %s19
      // Predicated region
      $region65: #{tpu_custom_call.1} parent=5 // pred_check
        %p2142 = pneg %p2141
      $region66: #{tpu_custom_call.1} parent=5 // pred_check_branch
        %2144 = sbr.rel (%p2142) target = $region68
      $region67: #{tpu_custom_call.1} parent=5 // pred_region
        %s2145 = ssub.s32 %s19, 2
        // Predicated region
        $region69: #{tpu_custom_call.1} parent=67 // pred_check
          %p2146 = pneg %p263
        $region70: #{tpu_custom_call.1} parent=67 // pred_check_branch
          %2148 = sbr.rel (%p2146) target = $region72
        $region71: #{tpu_custom_call.1} parent=67 // pred_region
          %s2149 = sand.u32 %s248, 1
          %s2150 = scalar_lea.sflag [#allocation3], %s2149
          %s2151 = sand.u32 %s248, 1
          %s2152 = smul.addr %s2151, 8
          %s2153 = scalar_lea.vmem [#allocation2], %s2152
          %2154 = dma.done %s2150, 128
        $region72: #{tpu_custom_call.1} parent=67 // pred_fallthru
          _
      $region68: #{tpu_custom_call.1} parent=5 // pred_fallthru
        _
    $region6: #{tpu_custom_call.1} parent=1 // loop_footer
      %s23 = sadd.s32 1, %s19
    $region7: #{tpu_custom_call.1} parent=1 // loop_footer_branch
      %18 = sbr.rel target = $region3
    $region8: #{tpu_custom_call.1} parent=1 // loop_exit
      _
    %2155 = vsyncpa [#allocation3], 1
    %s2156 = scalar_lea.sflag [#allocation3], 1
    %2157 = vsyncpa %s2156, 1

</llo_original>
